<compile_context>
chip_gen: v7x
topology: tpu7x:2x2x1
jax: 0.10.0
libtpu: 0.0.40
codegen_flags: <defaults>
</compile_context>

<pallas_src>
import functools

import jax
import jax.numpy as jnp
from jax.experimental import pallas as pl
from jax.experimental.pallas import tpu as pltpu

GELU_GAMMA = 1.7015043497085571   # NFNet scaled-GELU gain
ALPHA = 0.2                       # NF residual alpha
SE_ATTN_GAIN = 2.0                # NFNet SE attention gain
SKIPINIT_GAIN = 1.0               # deterministic (timm inits to 0; use 1 so branch is live)

IN_CH, STEM_CH, MID_CH, OUT_CH, FIN_CH, NUM_CLASSES = 3, 16, 16, 32, 64, 11
CP = 128                          # channel pad: lane-dense (x128) activations everywhere
TAIL_SCALE = SE_ATTN_GAIN * SKIPINIT_GAIN * ALPHA


def _scaled_gelu(x):
    # TODO(synk): timm NFNet uses exact (erf) GELU; tanh approximation kept here.
    return jax.nn.gelu(x, approximate=True) * GELU_GAMMA


# -----------------------------------------------------------------------------
# Pallas kernels
# -----------------------------------------------------------------------------
def _stem_c1_kernel(x_ref, ws_ref, bs_ref, w1_ref, b1_ref, pre_ref, c1_ref):
    # stem 3x3 WS-conv (as matmul on patches) -> block pre-activation (beta=1),
    # then conv1 (1x1) + act2, all on the same resident tile. bf16 MXU, f32 acc.
    pre = jnp.dot(x_ref[...].astype(jnp.bfloat16), ws_ref[...],
                  preferred_element_type=jnp.float32) + bs_ref[...]
    pre = _scaled_gelu(pre)
    pre_bf = pre.astype(jnp.bfloat16)
    pre_ref[...] = pre_bf                                   # shortcut-path copy (bf16)
    c1 = jnp.dot(pre_bf, w1_ref[...],
                 preferred_element_type=jnp.float32) + b1_ref[...]
    c1_ref[...] = _scaled_gelu(c1).astype(jnp.bfloat16)


def _mm_act_kernel(x_ref, w_ref, b_ref, o_ref, *, act):
    acc = jnp.dot(x_ref[...].astype(jnp.bfloat16), w_ref[...],
                  preferred_element_type=jnp.float32) + b_ref[...]
    if act == "scaled_gelu":
        acc = _scaled_gelu(acc)
    o_ref[...] = acc.astype(o_ref.dtype)


def _conv3_se_tail_kernel(x_ref, pre_ref, w3_ref, b3_ref, wds_ref, bds_ref,
                          w1_ref, b1_ref, w2_ref, b2_ref, o_ref):
    # One batch sample per grid step: conv3 (1x1) + SE attention + downsample
    # shortcut (1x1 matmul on avg-pooled pre-activation) + residual tail.
    out = jnp.dot(x_ref[0], w3_ref[...],
                  preferred_element_type=jnp.float32) + b3_ref[...]          # (S, C) f32
    # SE (attn_last): global-avg-pool over spatial -> FC-ReLU -> FC-Sigmoid.
    pooled = jnp.mean(out, axis=0, keepdims=True)                            # (1, C)
    h = jnp.dot(pooled.astype(jnp.bfloat16), w1_ref[...],
                preferred_element_type=jnp.float32) + b1_ref[...]
    h = jnp.maximum(h, 0.0)
    gate = jax.nn.sigmoid(jnp.dot(h.astype(jnp.bfloat16), w2_ref[...],
                                  preferred_element_type=jnp.float32) + b2_ref[...])
    # shortcut = (avgpool2x2(pre)) @ ds_w + ds_b   (ds matmul folded in-kernel)
    shortcut = jnp.dot(pre_ref[0], wds_ref[...],
                       preferred_element_type=jnp.float32) + bds_ref[...]
    # res = (attn_gain * gate * out) * skipinit_gain * alpha + shortcut
    o_ref[0] = (out * gate * TAIL_SCALE + shortcut).astype(o_ref.dtype)


def _fin_pool_head_kernel(x_ref, wf_ref, bf_ref, wh_ref, bh_ref, o_ref):
    # One batch sample per grid step: final 1x1 WS-conv + scaled GELU,
    # global-average-pool, classifier Linear (output padded to 128 lanes).
    f = jnp.dot(x_ref[0], wf_ref[...],
                preferred_element_type=jnp.float32) + bf_ref[...]
    f = _scaled_gelu(f)
    pooled = jnp.mean(f, axis=0, keepdims=True)                              # (1, C)
    o_ref[0] = jnp.dot(pooled.astype(jnp.bfloat16), wh_ref[...],
                       preferred_element_type=jnp.float32) + bh_ref[...]


# -----------------------------------------------------------------------------
# pallas_call wrappers
# -----------------------------------------------------------------------------
def _pick_bm(M, tm):
    """Row-tile size: <= tm, multiple of 8, and >=2 grid blocks whenever M > 8
    so v7x's two TensorCores both get work."""
    if M <= 8:
        return M
    return min(tm, pl.cdiv(pl.cdiv(M, 2), 8) * 8)


def _pad_rows(x, mp):
    M = x.shape[0]
    return x if mp == M else jnp.pad(x, ((0, mp - M), (0, 0)))


def stem_c1(cols, gp, tm=1024):
    """Fused stem conv + pre-activation + conv1(1x1) + act2; dual bf16 outputs."""
    M, K = cols.shape
    bm = _pick_bm(M, tm)
    mp = pl.cdiv(M, bm) * bm
    cols = _pad_rows(cols, mp)
    pre, c1 = pl.pallas_call(
        _stem_c1_kernel,
        grid=(mp // bm,),
        in_specs=[
            pl.BlockSpec((bm, K), lambda i: (i, 0)),
            pl.BlockSpec((K, CP), lambda i: (0, 0)),
            pl.BlockSpec((1, CP), lambda i: (0, 0)),
            pl.BlockSpec((CP, CP), lambda i: (0, 0)),
            pl.BlockSpec((1, CP), lambda i: (0, 0)),
        ],
        out_specs=[
            pl.BlockSpec((bm, CP), lambda i: (i, 0)),
            pl.BlockSpec((bm, CP), lambda i: (i, 0)),
        ],
        out_shape=(
            jax.ShapeDtypeStruct((mp, CP), jnp.bfloat16),
            jax.ShapeDtypeStruct((mp, CP), jnp.bfloat16),
        ),
        compiler_params=pltpu.CompilerParams(dimension_semantics=("parallel",)),
    )(cols, gp["stem_w"], gp["stem_b"], gp["c1_w"], gp["c1_b"])
    if mp != M:
        pre, c1 = pre[:M], c1[:M]
    return pre, c1


def matmul_act(x, w_bf16, b, act="none", tm=1024, out_dtype=jnp.bfloat16):
    """(M,K) @ (K,N) + bias with fused activation; M-tiled, 'parallel' grid axis."""
    M, K = x.shape
    K2, N = w_bf16.shape
    assert K == K2 and b.shape == (1, N)
    bm = _pick_bm(M, tm)
    mp = pl.cdiv(M, bm) * bm
    x = _pad_rows(x, mp)
    kernel = functools.partial(_mm_act_kernel, act=act)
    out = pl.pallas_call(
        kernel,
        grid=(mp // bm,),
        in_specs=[
            pl.BlockSpec((bm, K), lambda i: (i, 0)),
            pl.BlockSpec((K, N), lambda i: (0, 0)),
            pl.BlockSpec((1, N), lambda i: (0, 0)),
        ],
        out_specs=pl.BlockSpec((bm, N), lambda i: (i, 0)),
        out_shape=jax.ShapeDtypeStruct((mp, N), out_dtype),
        compiler_params=pltpu.CompilerParams(dimension_semantics=("parallel",)),
    )(x, w_bf16, b)
    return out if mp == M else out[:M]


def conv3_se_tail(x3, pre_pool3, gp, *, batch, spatial):
    # TODO(synk): at real resolutions spatially tile this kernel (partial-pool
    # accumulate pass + gate/residual pass) to fit v7x's 64 MiB VMEM.
    return pl.pallas_call(
        _conv3_se_tail_kernel,
        grid=(batch,),
        in_specs=[
            pl.BlockSpec((1, spatial, CP), lambda b: (b, 0, 0)),
            pl.BlockSpec((1, spatial, CP), lambda b: (b, 0, 0)),
            pl.BlockSpec((CP, CP), lambda b: (0, 0)),
            pl.BlockSpec((1, CP), lambda b: (0, 0)),
            pl.BlockSpec((CP, CP), lambda b: (0, 0)),
            pl.BlockSpec((1, CP), lambda b: (0, 0)),
            pl.BlockSpec((CP, CP), lambda b: (0, 0)),
            pl.BlockSpec((1, CP), lambda b: (0, 0)),
            pl.BlockSpec((CP, CP), lambda b: (0, 0)),
            pl.BlockSpec((1, CP), lambda b: (0, 0)),
        ],
        out_specs=pl.BlockSpec((1, spatial, CP), lambda b: (b, 0, 0)),
        out_shape=jax.ShapeDtypeStruct((batch, spatial, CP), jnp.bfloat16),
        compiler_params=pltpu.CompilerParams(dimension_semantics=("parallel",)),
    )(x3, pre_pool3, gp["c3_w"], gp["c3_b"], gp["ds_w"], gp["ds_b"],
      gp["se_w1"], gp["se_b1"], gp["se_w2"], gp["se_b2"])


def fin_pool_head(res3, gp, *, batch, spatial):
    out = pl.pallas_call(
        _fin_pool_head_kernel,
        grid=(batch,),
        in_specs=[
            pl.BlockSpec((1, spatial, CP), lambda b: (b, 0, 0)),
            pl.BlockSpec((CP, CP), lambda b: (0, 0)),
            pl.BlockSpec((1, CP), lambda b: (0, 0)),
            pl.BlockSpec((CP, CP), lambda b: (0, 0)),
            pl.BlockSpec((1, CP), lambda b: (0, 0)),
        ],
        out_specs=pl.BlockSpec((1, 1, CP), lambda b: (b, 0, 0)),
        out_shape=jax.ShapeDtypeStruct((batch, 1, CP), jnp.float32),
        compiler_params=pltpu.CompilerParams(dimension_semantics=("parallel",)),
    )(res3, gp["fin_w"], gp["fin_b"], gp["head_w"], gp["head_b"])
    return out.reshape(batch, CP)


# -----------------------------------------------------------------------------
# JAX-side glue (im2col for 3x3 convs only; layout work is one-time / trivial)
# -----------------------------------------------------------------------------
def im2col_nhwc(x_nhwc, kh, kw, stride, pad):
    """Conv patches in NHWC; feature ordering is (kh, kw, c). Returns (rows, meta).
    TODO(synk): replace with in-kernel 9-shift accumulation at real resolution."""
    B, H, W, C = x_nhwc.shape
    xp = jnp.pad(x_nhwc, ((0, 0), (pad, pad), (pad, pad), (0, 0)))
    Ho = (H + 2 * pad - kh) // stride + 1
    Wo = (W + 2 * pad - kw) // stride + 1
    cols = []
    for i in range(kh):
        for j in range(kw):
            cols.append(xp[:, i:i + stride * Ho:stride, j:j + stride * Wo:stride, :])
    cols = jnp.concatenate(cols, axis=-1)
    return cols.reshape(B * Ho * Wo, kh * kw * C), (B, Ho, Wo)


def std_weight(w_oihw, gain, eps=1e-6):
    """timm ScaledStdConv2d weight transform (one-time parameter prep)."""
    O = w_oihw.shape[0]
    fan_in = w_oihw.shape[1] * w_oihw.shape[2] * w_oihw.shape[3]
    mean = jnp.mean(w_oihw, axis=(1, 2, 3), keepdims=True)
    var = jnp.var(w_oihw, axis=(1, 2, 3), keepdims=True)
    scale = (gain * (fan_in ** -0.5)).reshape(O, 1, 1, 1)
    return (w_oihw - mean) / jnp.sqrt(var + eps) * scale


def prepare_params(p):
    """One-time prep, hoisted out of the forward pass: weight standardization,
    GEMM layout ((kh,kw,c) ordering), zero-pad channel dims to 128 lanes, bf16 cast."""
    def pad2(m, rows, cols):
        return jnp.pad(m, ((0, rows - m.shape[0]), (0, cols - m.shape[1])))

    def bias(b):
        return jnp.pad(b, (0, CP - b.shape[0])).reshape(1, CP).astype(jnp.float32)

    def conv_gemm(w_oihw, gain, pad_k=False):
        w = std_weight(w_oihw, gain)
        O, I, kh, kw = w.shape
        g = jnp.transpose(w, (2, 3, 1, 0)).reshape(kh * kw * I, O)
        rows = CP if pad_k else g.shape[0]
        return pad2(g, rows, CP).astype(jnp.bfloat16)

    return {
        "stem_w": conv_gemm(p["stem_w"], p["stem_g"]),              # (27, 128)
        "stem_b": bias(p["stem_b"]),
        "ds_w":   conv_gemm(p["ds_w"], p["ds_g"], pad_k=True),      # (128, 128)
        "ds_b":   bias(p["ds_b"]),
        "c1_w":   conv_gemm(p["c1_w"], p["c1_g"], pad_k=True),
        "c1_b":   bias(p["c1_b"]),
        "c2_w":   conv_gemm(p["c2_w"], p["c2_g"]),                  # (144, 128)
        "c2_b":   bias(p["c2_b"]),
        "c3_w":   conv_gemm(p["c3_w"], p["c3_g"], pad_k=True),
        "c3_b":   bias(p["c3_b"]),
        "se_w1":  pad2(p["se_w1"], CP, CP).astype(jnp.bfloat16),
        "se_b1":  bias(p["se_b1"]),
        "se_w2":  pad2(p["se_w2"], CP, CP).astype(jnp.bfloat16),
        "se_b2":  bias(p["se_b2"]),
        "fin_w":  conv_gemm(p["fin_w"], p["fin_g"], pad_k=True),
        "fin_b":  bias(p["fin_b"]),
        "head_w": pad2(p["head_w"], CP, CP).astype(jnp.bfloat16),
        "head_b": bias(p["head_b"]),
    }


# -----------------------------------------------------------------------------
# Mini-NFNet forward
# -----------------------------------------------------------------------------
def nfnet_forward(x_nchw, gp):
    B = x_nchw.shape[0]
    x = jnp.transpose(x_nchw, (0, 2, 3, 1))          # single NCHW -> NHWC at ingress

    # Stem: 3x3 WS-conv stride 2 -> NF block pre-activation (scaled GELU, beta=1)
    # fused with conv1 (1x1) + act2 in ONE dual-output kernel.
    # TODO(synk): timm nfnet_f1 stem has 4 convs; a single WS-conv stem is used here.
    cols, (_, H1, W1) = im2col_nhwc(x, 3, 3, 2, 1)
    pre, c1 = stem_c1(cols.astype(jnp.bfloat16), gp)       # both (B*H1*W1, 128) bf16

    # Downsample shortcut path: 2x2 average pool of the pre-activation (timm:
    # AvgPool2d(2) + 1x1 WS-conv); the 1x1 matmul is fused into conv3_se_tail.
    H2, W2 = H1 // 2, W1 // 2
    pre_pool = (pre.reshape(B, H2, 2, W2, 2, CP).astype(jnp.float32)
                .mean(axis=(2, 4)).astype(jnp.bfloat16).reshape(B, H2 * W2, CP))

    # conv2: 3x3 stride-2 WS-conv + act3 (im2col on the real MID_CH channels only).
    # TODO(synk): conv2 in nfnet_f1 is a grouped 3x3 conv; groups=1 used here.
    cols2, _ = im2col_nhwc(c1.reshape(B, H1, W1, CP)[..., :MID_CH], 3, 3, 2, 1)
    out2 = matmul_act(cols2, gp["c2_w"], gp["c2_b"], act="scaled_gelu")  # bf16

    # conv3 (1x1) + SE attention + downsample matmul + residual tail: one fused
    # kernel, grid over batch.
    res = conv3_se_tail(out2.reshape(B, H2 * W2, CP), pre_pool, gp,
                        batch=B, spatial=H2 * W2)

    # Head: final 1x1 WS-conv + scaled GELU + global-avg-pool + Linear(11), fused.
    logits = fin_pool_head(res, gp, batch=B, spatial=H2 * W2)
    return logits[:, :NUM_CLASSES]


# -----------------------------------------------------------------------------
# Deterministic raw parameter init
# -----------------------------------------------------------------------------
def init_params(key):
    ks = jax.random.split(key, 10)

    def nrm(k, shape, scale=0.1):
        return scale * jax.random.normal(k, shape, dtype=jnp.float32)

    p = {}
    p["stem_w"] = nrm(ks[0], (STEM_CH, IN_CH, 3, 3))
    p["stem_g"] = jnp.ones((STEM_CH,), jnp.float32)
    p["stem_b"] = jnp.zeros((STEM_CH,), jnp.float32)

    p["ds_w"] = nrm(ks[1], (OUT_CH, STEM_CH, 1, 1))
    p["ds_g"] = jnp.ones((OUT_CH,), jnp.float32)
    p["ds_b"] = jnp.zeros((OUT_CH,), jnp.float32)

    p["c1_w"] = nrm(ks[2], (MID_CH, STEM_CH, 1, 1))
    p["c1_g"] = jnp.ones((MID_CH,), jnp.float32)
    p["c1_b"] = jnp.zeros((MID_CH,), jnp.float32)

    p["c2_w"] = nrm(ks[3], (MID_CH, MID_CH, 3, 3))
    p["c2_g"] = jnp.ones((MID_CH,), jnp.float32)
    p["c2_b"] = jnp.zeros((MID_CH,), jnp.float32)

    p["c3_w"] = nrm(ks[4], (OUT_CH, MID_CH, 1, 1))
    p["c3_g"] = jnp.ones((OUT_CH,), jnp.float32)
    p["c3_b"] = jnp.zeros((OUT_CH,), jnp.float32)

    se_mid = OUT_CH // 2
    p["se_w1"] = nrm(ks[5], (OUT_CH, se_mid))        # stored (in, out)
    p["se_b1"] = jnp.zeros((se_mid,), jnp.float32)
    p["se_w2"] = nrm(ks[6], (se_mid, OUT_CH))
    p["se_b2"] = jnp.zeros((OUT_CH,), jnp.float32)

    p["fin_w"] = nrm(ks[7], (FIN_CH, OUT_CH, 1, 1))
    p["fin_g"] = jnp.ones((FIN_CH,), jnp.float32)
    p["fin_b"] = jnp.zeros((FIN_CH,), jnp.float32)

    p["head_w"] = nrm(ks[8], (FIN_CH, NUM_CLASSES))  # stored (in, out) = Linear(FIN_CH, 11)
    p["head_b"] = jnp.zeros((NUM_CLASSES,), jnp.float32)
    return p


if __name__ == "__main__":
    key = jax.random.PRNGKey(0)
    k_x, k_p = jax.random.split(key)
    # small NCHW image batch, like the PyTorch module's input
    x = jax.random.normal(k_x, (2, 3, 16, 16), dtype=jnp.float32)

    raw_params = init_params(k_p)
    gemm_params = prepare_params(raw_params)   # WS + layout + bf16, hoisted out of the forward

    logits = jax.jit(nfnet_forward)(x, gemm_params)
    logits = jax.block_until_ready(logits)

    assert logits.shape == (2, NUM_CLASSES), logits.shape
    assert jnp.all(jnp.isfinite(logits))
    print("KERNEL_OK")
</pallas_src>

<mosaic_0001>
module attributes {stable_mosaic.version = 11 : i64} {
  func.func @_stem_c1_kernel(%arg0: i32, %arg1: memref<64x27xbf16, #tpu.memory_space<vmem>>, %arg2: memref<27x128xbf16, #tpu.memory_space<vmem>>, %arg3: memref<1x128xf32, #tpu.memory_space<vmem>>, %arg4: memref<128x128xbf16, #tpu.memory_space<vmem>>, %arg5: memref<1x128xf32, #tpu.memory_space<vmem>>, %arg6: memref<64x128xbf16, #tpu.memory_space<vmem>>, %arg7: memref<64x128xbf16, #tpu.memory_space<vmem>>) attributes {dimension_semantics = [#tpu.dimension_semantics<parallel>], iteration_bounds = array<i64: 2>, scalar_prefetch = 0 : i64, scratch_operands = 0 : i64, tpu.core_type = #tpu.core_type<tc>, window_params = [{transform_indices = @transform_0, window_bounds = array<i64: 64, 27>}, {pipeline_mode = #tpu.pipeline_mode<synchronous>, transform_indices = @transform_1, window_bounds = array<i64: 27, 128>}, {pipeline_mode = #tpu.pipeline_mode<synchronous>, transform_indices = @transform_2, window_bounds = array<i64: 1, 128>}, {pipeline_mode = #tpu.pipeline_mode<synchronous>, transform_indices = @transform_3, window_bounds = array<i64: 128, 128>}, {pipeline_mode = #tpu.pipeline_mode<synchronous>, transform_indices = @transform_4, window_bounds = array<i64: 1, 128>}, {transform_indices = @transform_5, window_bounds = array<i64: 64, 128>}, {transform_indices = @transform_6, window_bounds = array<i64: 64, 128>}]} {
    %c0 = arith.constant 0 : index
    %c0_0 = arith.constant 0 : index
    %0 = vector.load %arg1[%c0, %c0_0] : memref<64x27xbf16, #tpu.memory_space<vmem>>, vector<64x27xbf16>
    %c0_1 = arith.constant 0 : index
    %c0_2 = arith.constant 0 : index
    %1 = vector.load %arg2[%c0_1, %c0_2] : memref<27x128xbf16, #tpu.memory_space<vmem>>, vector<27x128xbf16>
    %cst = arith.constant dense<0.000000e+00> : vector<64x128xf32>
    %2 = tpu.matmul %0, %1, %cst {dimension_numbers = #tpu.dot_dimension_numbers<[1], [0], [0], [1], [0, 0, 1, 1], [], []>} : vector<64x27xbf16>, vector<27x128xbf16>, vector<64x128xf32> -> vector<64x128xf32>
    %c0_3 = arith.constant 0 : index
    %c0_4 = arith.constant 0 : index
    %3 = vector.load %arg3[%c0_3, %c0_4] : memref<1x128xf32, #tpu.memory_space<vmem>>, vector<1x128xf32>
    %4 = vector.broadcast %3 : vector<1x128xf32> to vector<64x128xf32>
    %5 = arith.addf %2, %4 : vector<64x128xf32>
    %6 = arith.mulf %5, %5 : vector<64x128xf32>
    %7 = arith.mulf %5, %6 : vector<64x128xf32>
    %cst_5 = arith.constant 4.471500e-02 : f32
    %8 = vector.broadcast %cst_5 : f32 to vector<64x128xf32>
    %9 = arith.mulf %8, %7 : vector<64x128xf32>
    %10 = arith.addf %5, %9 : vector<64x128xf32>
    %cst_6 = arith.constant 0.797884583 : f32
    %11 = vector.broadcast %cst_6 : f32 to vector<64x128xf32>
    %12 = arith.mulf %11, %10 : vector<64x128xf32>
    %13 = math.tanh %12 : vector<64x128xf32>
    %cst_7 = arith.constant 1.000000e+00 : f32
    %14 = vector.broadcast %cst_7 : f32 to vector<64x128xf32>
    %15 = arith.addf %14, %13 : vector<64x128xf32>
    %cst_8 = arith.constant 5.000000e-01 : f32
    %16 = vector.broadcast %cst_8 : f32 to vector<64x128xf32>
    %17 = arith.mulf %16, %15 : vector<64x128xf32>
    %18 = arith.mulf %5, %17 : vector<64x128xf32>
    %cst_9 = arith.constant 1.70150435 : f32
    %19 = vector.broadcast %cst_9 : f32 to vector<64x128xf32>
    %20 = arith.mulf %18, %19 : vector<64x128xf32>
    %21 = arith.truncf %20 : vector<64x128xf32> to vector<64x128xbf16>
    %c0_10 = arith.constant 0 : index
    %c0_11 = arith.constant 0 : index
    %22 = vector.load %arg6[%c0_10, %c0_11] : memref<64x128xbf16, #tpu.memory_space<vmem>>, vector<64x128xbf16>
    tpu.vector_store %arg6[%c0_10, %c0_11], %21 {strides = array<i32>} : memref<64x128xbf16, #tpu.memory_space<vmem>>, vector<64x128xbf16>,
    %c0_12 = arith.constant 0 : index
    %c0_13 = arith.constant 0 : index
    %23 = vector.load %arg4[%c0_12, %c0_13] : memref<128x128xbf16, #tpu.memory_space<vmem>>, vector<128x128xbf16>
    %cst_14 = arith.constant dense<0.000000e+00> : vector<64x128xf32>
    %24 = tpu.matmul %21, %23, %cst_14 {dimension_numbers = #tpu.dot_dimension_numbers<[1], [0], [0], [1], [0, 0, 1, 1], [], []>} : vector<64x128xbf16>, vector<128x128xbf16>, vector<64x128xf32> -> vector<64x128xf32>
    %c0_15 = arith.constant 0 : index
    %c0_16 = arith.constant 0 : index
    %25 = vector.load %arg5[%c0_15, %c0_16] : memref<1x128xf32, #tpu.memory_space<vmem>>, vector<1x128xf32>
    %26 = vector.broadcast %25 : vector<1x128xf32> to vector<64x128xf32>
    %27 = arith.addf %24, %26 : vector<64x128xf32>
    %28 = arith.mulf %27, %27 : vector<64x128xf32>
    %29 = arith.mulf %27, %28 : vector<64x128xf32>
    %cst_17 = arith.constant 4.471500e-02 : f32
    %30 = vector.broadcast %cst_17 : f32 to vector<64x128xf32>
    %31 = arith.mulf %30, %29 : vector<64x128xf32>
    %32 = arith.addf %27, %31 : vector<64x128xf32>
    %cst_18 = arith.constant 0.797884583 : f32
    %33 = vector.broadcast %cst_18 : f32 to vector<64x128xf32>
    %34 = arith.mulf %33, %32 : vector<64x128xf32>
    %35 = math.tanh %34 : vector<64x128xf32>
    %cst_19 = arith.constant 1.000000e+00 : f32
    %36 = vector.broadcast %cst_19 : f32 to vector<64x128xf32>
    %37 = arith.addf %36, %35 : vector<64x128xf32>
    %cst_20 = arith.constant 5.000000e-01 : f32
    %38 = vector.broadcast %cst_20 : f32 to vector<64x128xf32>
    %39 = arith.mulf %38, %37 : vector<64x128xf32>
    %40 = arith.mulf %27, %39 : vector<64x128xf32>
    %cst_21 = arith.constant 1.70150435 : f32
    %41 = vector.broadcast %cst_21 : f32 to vector<64x128xf32>
    %42 = arith.mulf %40, %41 : vector<64x128xf32>
    %43 = arith.truncf %42 : vector<64x128xf32> to vector<64x128xbf16>
    %c0_22 = arith.constant 0 : index
    %c0_23 = arith.constant 0 : index
    %44 = vector.load %arg7[%c0_22, %c0_23] : memref<64x128xbf16, #tpu.memory_space<vmem>>, vector<64x128xbf16>
    tpu.vector_store %arg7[%c0_22, %c0_23], %43 {strides = array<i32>} : memref<64x128xbf16, #tpu.memory_space<vmem>>, vector<64x128xbf16>,
    return
  }
  func.func @transform_0(%arg0: i32) -> (i32, i32) {
    %c0_i32 = arith.constant 0 : i32
    %c0_i32_0 = arith.constant 0 : i32
    return %arg0, %c0_i32 : i32, i32
  }
  func.func @transform_1(%arg0: i32) -> (i32, i32) {
    %c0_i32 = arith.constant 0 : i32
    %c0_i32_0 = arith.constant 0 : i32
    %c0_i32_1 = arith.constant 0 : i32
    return %c0_i32, %c0_i32_0 : i32, i32
  }
  func.func @transform_2(%arg0: i32) -> (i32, i32) {
    %c0_i32 = arith.constant 0 : i32
    %c0_i32_0 = arith.constant 0 : i32
    %c0_i32_1 = arith.constant 0 : i32
    return %c0_i32, %c0_i32_0 : i32, i32
  }
  func.func @transform_3(%arg0: i32) -> (i32, i32) {
    %c0_i32 = arith.constant 0 : i32
    %c0_i32_0 = arith.constant 0 : i32
    %c0_i32_1 = arith.constant 0 : i32
    return %c0_i32, %c0_i32_0 : i32, i32
  }
  func.func @transform_4(%arg0: i32) -> (i32, i32) {
    %c0_i32 = arith.constant 0 : i32
    %c0_i32_0 = arith.constant 0 : i32
    %c0_i32_1 = arith.constant 0 : i32
    return %c0_i32, %c0_i32_0 : i32, i32
  }
  func.func @transform_5(%arg0: i32) -> (i32, i32) {
    %c0_i32 = arith.constant 0 : i32
    %c0_i32_0 = arith.constant 0 : i32
    return %arg0, %c0_i32 : i32, i32
  }
  func.func @transform_6(%arg0: i32) -> (i32, i32) {
    %c0_i32 = arith.constant 0 : i32
    %c0_i32_0 = arith.constant 0 : i32
    return %arg0, %c0_i32 : i32, i32
  }
}

module attributes {stable_mosaic.version = 11 : i64} {
  func.func @_mm_act_kernel(%arg0: i32, %arg1: memref<16x144xbf16, #tpu.memory_space<vmem>>, %arg2: memref<144x128xbf16, #tpu.memory_space<vmem>>, %arg3: memref<1x128xf32, #tpu.memory_space<vmem>>, %arg4: memref<16x128xbf16, #tpu.memory_space<vmem>>) attributes {dimension_semantics = [#tpu.dimension_semantics<parallel>], iteration_bounds = array<i64: 2>, scalar_prefetch = 0 : i64, scratch_operands = 0 : i64, tpu.core_type = #tpu.core_type<tc>, window_params = [{transform_indices = @transform_0, window_bounds = array<i64: 16, 144>}, {pipeline_mode = #tpu.pipeline_mode<synchronous>, transform_indices = @transform_1, window_bounds = array<i64: 144, 128>}, {pipeline_mode = #tpu.pipeline_mode<synchronous>, transform_indices = @transform_2, window_bounds = array<i64: 1, 128>}, {transform_indices = @transform_3, window_bounds = array<i64: 16, 128>}]} {
    %c0 = arith.constant 0 : index
    %c0_0 = arith.constant 0 : index
    %0 = vector.load %arg1[%c0, %c0_0] : memref<16x144xbf16, #tpu.memory_space<vmem>>, vector<16x144xbf16>
    %c0_1 = arith.constant 0 : index
    %c0_2 = arith.constant 0 : index
    %1 = vector.load %arg2[%c0_1, %c0_2] : memref<144x128xbf16, #tpu.memory_space<vmem>>, vector<144x128xbf16>
    %cst = arith.constant dense<0.000000e+00> : vector<16x128xf32>
    %2 = tpu.matmul %0, %1, %cst {dimension_numbers = #tpu.dot_dimension_numbers<[1], [0], [0], [1], [0, 0, 1, 1], [], []>} : vector<16x144xbf16>, vector<144x128xbf16>, vector<16x128xf32> -> vector<16x128xf32>
    %c0_3 = arith.constant 0 : index
    %c0_4 = arith.constant 0 : index
    %3 = vector.load %arg3[%c0_3, %c0_4] : memref<1x128xf32, #tpu.memory_space<vmem>>, vector<1x128xf32>
    %4 = vector.broadcast %3 : vector<1x128xf32> to vector<16x128xf32>
    %5 = arith.addf %2, %4 : vector<16x128xf32>
    %6 = arith.mulf %5, %5 : vector<16x128xf32>
    %7 = arith.mulf %5, %6 : vector<16x128xf32>
    %cst_5 = arith.constant 4.471500e-02 : f32
    %8 = vector.broadcast %cst_5 : f32 to vector<16x128xf32>
    %9 = arith.mulf %8, %7 : vector<16x128xf32>
    %10 = arith.addf %5, %9 : vector<16x128xf32>
    %cst_6 = arith.constant 0.797884583 : f32
    %11 = vector.broadcast %cst_6 : f32 to vector<16x128xf32>
    %12 = arith.mulf %11, %10 : vector<16x128xf32>
    %13 = math.tanh %12 : vector<16x128xf32>
    %cst_7 = arith.constant 1.000000e+00 : f32
    %14 = vector.broadcast %cst_7 : f32 to vector<16x128xf32>
    %15 = arith.addf %14, %13 : vector<16x128xf32>
    %cst_8 = arith.constant 5.000000e-01 : f32
    %16 = vector.broadcast %cst_8 : f32 to vector<16x128xf32>
    %17 = arith.mulf %16, %15 : vector<16x128xf32>
    %18 = arith.mulf %5, %17 : vector<16x128xf32>
    %cst_9 = arith.constant 1.70150435 : f32
    %19 = vector.broadcast %cst_9 : f32 to vector<16x128xf32>
    %20 = arith.mulf %18, %19 : vector<16x128xf32>
    %21 = arith.truncf %20 : vector<16x128xf32> to vector<16x128xbf16>
    %c0_10 = arith.constant 0 : index
    %c0_11 = arith.constant 0 : index
    %22 = vector.load %arg4[%c0_10, %c0_11] : memref<16x128xbf16, #tpu.memory_space<vmem>>, vector<16x128xbf16>
    tpu.vector_store %arg4[%c0_10, %c0_11], %21 {strides = array<i32>} : memref<16x128xbf16, #tpu.memory_space<vmem>>, vector<16x128xbf16>,
    return
  }
  func.func @transform_0(%arg0: i32) -> (i32, i32) {
    %c0_i32 = arith.constant 0 : i32
    %c0_i32_0 = arith.constant 0 : i32
    return %arg0, %c0_i32 : i32, i32
  }
  func.func @transform_1(%arg0: i32) -> (i32, i32) {
    %c0_i32 = arith.constant 0 : i32
    %c0_i32_0 = arith.constant 0 : i32
    %c0_i32_1 = arith.constant 0 : i32
    return %c0_i32, %c0_i32_0 : i32, i32
  }
  func.func @transform_2(%arg0: i32) -> (i32, i32) {
    %c0_i32 = arith.constant 0 : i32
    %c0_i32_0 = arith.constant 0 : i32
    %c0_i32_1 = arith.constant 0 : i32
    return %c0_i32, %c0_i32_0 : i32, i32
  }
  func.func @transform_3(%arg0: i32) -> (i32, i32) {
    %c0_i32 = arith.constant 0 : i32
    %c0_i32_0 = arith.constant 0 : i32
    return %arg0, %c0_i32 : i32, i32
  }
}

module attributes {stable_mosaic.version = 11 : i64} {
  func.func @_fin_pool_head_kernel(%arg0: i32, %arg1: memref<1x16x128xbf16, #tpu.memory_space<vmem>>, %arg2: memref<128x128xbf16, #tpu.memory_space<vmem>>, %arg3: memref<1x128xf32, #tpu.memory_space<vmem>>, %arg4: memref<128x128xbf16, #tpu.memory_space<vmem>>, %arg5: memref<1x128xf32, #tpu.memory_space<vmem>>, %arg6: memref<1x1x128xf32, #tpu.memory_space<vmem>>) attributes {dimension_semantics = [#tpu.dimension_semantics<parallel>], iteration_bounds = array<i64: 2>, scalar_prefetch = 0 : i64, scratch_operands = 0 : i64, tpu.core_type = #tpu.core_type<tc>, window_params = [{transform_indices = @transform_0, window_bounds = array<i64: 1, 16, 128>}, {pipeline_mode = #tpu.pipeline_mode<synchronous>, transform_indices = @transform_1, window_bounds = array<i64: 128, 128>}, {pipeline_mode = #tpu.pipeline_mode<synchronous>, transform_indices = @transform_2, window_bounds = array<i64: 1, 128>}, {pipeline_mode = #tpu.pipeline_mode<synchronous>, transform_indices = @transform_3, window_bounds = array<i64: 128, 128>}, {pipeline_mode = #tpu.pipeline_mode<synchronous>, transform_indices = @transform_4, window_bounds = array<i64: 1, 128>}, {transform_indices = @transform_5, window_bounds = array<i64: 1, 1, 128>}]} {
    %c0 = arith.constant 0 : index
    %c0_0 = arith.constant 0 : index
    %c0_1 = arith.constant 0 : index
    %0 = vector.load %arg1[%c0, %c0_0, %c0_1] : memref<1x16x128xbf16, #tpu.memory_space<vmem>>, vector<1x16x128xbf16>
    %1 = vector.shape_cast %0 : vector<1x16x128xbf16> to vector<16x128xbf16>
    %c0_2 = arith.constant 0 : index
    %c0_3 = arith.constant 0 : index
    %2 = vector.load %arg2[%c0_2, %c0_3] : memref<128x128xbf16, #tpu.memory_space<vmem>>, vector<128x128xbf16>
    %cst = arith.constant dense<0.000000e+00> : vector<16x128xf32>
    %3 = tpu.matmul %1, %2, %cst {dimension_numbers = #tpu.dot_dimension_numbers<[1], [0], [0], [1], [0, 0, 1, 1], [], []>} : vector<16x128xbf16>, vector<128x128xbf16>, vector<16x128xf32> -> vector<16x128xf32>
    %c0_4 = arith.constant 0 : index
    %c0_5 = arith.constant 0 : index
    %4 = vector.load %arg3[%c0_4, %c0_5] : memref<1x128xf32, #tpu.memory_space<vmem>>, vector<1x128xf32>
    %5 = vector.broadcast %4 : vector<1x128xf32> to vector<16x128xf32>
    %6 = arith.addf %3, %5 : vector<16x128xf32>
    %7 = arith.mulf %6, %6 : vector<16x128xf32>
    %8 = arith.mulf %6, %7 : vector<16x128xf32>
    %cst_6 = arith.constant 4.471500e-02 : f32
    %9 = vector.broadcast %cst_6 : f32 to vector<16x128xf32>
    %10 = arith.mulf %9, %8 : vector<16x128xf32>
    %11 = arith.addf %6, %10 : vector<16x128xf32>
    %cst_7 = arith.constant 0.797884583 : f32
    %12 = vector.broadcast %cst_7 : f32 to vector<16x128xf32>
    %13 = arith.mulf %12, %11 : vector<16x128xf32>
    %14 = math.tanh %13 : vector<16x128xf32>
    %cst_8 = arith.constant 1.000000e+00 : f32
    %15 = vector.broadcast %cst_8 : f32 to vector<16x128xf32>
    %16 = arith.addf %15, %14 : vector<16x128xf32>
    %cst_9 = arith.constant 5.000000e-01 : f32
    %17 = vector.broadcast %cst_9 : f32 to vector<16x128xf32>
    %18 = arith.mulf %17, %16 : vector<16x128xf32>
    %19 = arith.mulf %6, %18 : vector<16x128xf32>
    %cst_10 = arith.constant 1.70150435 : f32
    %20 = vector.broadcast %cst_10 : f32 to vector<16x128xf32>
    %21 = arith.mulf %19, %20 : vector<16x128xf32>
    %cst_11 = arith.constant dense<0.000000e+00> : vector<128xf32>
    %22 = vector.multi_reduction <add>, %21, %cst_11 [0] : vector<16x128xf32> to vector<128xf32>
    %23 = vector.shape_cast %22 : vector<128xf32> to vector<1x128xf32>
    %cst_12 = arith.constant 1.600000e+01 : f32
    %24 = vector.broadcast %cst_12 : f32 to vector<1x128xf32>
    %25 = arith.divf %23, %24 : vector<1x128xf32>
    %26 = arith.truncf %25 : vector<1x128xf32> to vector<1x128xbf16>
    %c0_13 = arith.constant 0 : index
    %c0_14 = arith.constant 0 : index
    %27 = vector.load %arg4[%c0_13, %c0_14] : memref<128x128xbf16, #tpu.memory_space<vmem>>, vector<128x128xbf16>
    %cst_15 = arith.constant dense<0.000000e+00> : vector<1x128xf32>
    %28 = tpu.matmul %26, %27, %cst_15 {dimension_numbers = #tpu.dot_dimension_numbers<[1], [0], [0], [1], [0, 0, 1, 1], [], []>} : vector<1x128xbf16>, vector<128x128xbf16>, vector<1x128xf32> -> vector<1x128xf32>
    %c0_16 = arith.constant 0 : index
    %c0_17 = arith.constant 0 : index
    %29 = vector.load %arg5[%c0_16, %c0_17] : memref<1x128xf32, #tpu.memory_space<vmem>>, vector<1x128xf32>
    %30 = arith.addf %28, %29 : vector<1x128xf32>
    %c0_18 = arith.constant 0 : index
    %c0_19 = arith.constant 0 : index
    %c0_20 = arith.constant 0 : index
    %31 = vector.load %arg6[%c0_18, %c0_19, %c0_20] : memref<1x1x128xf32, #tpu.memory_space<vmem>>, vector<1x1x128xf32>
    %32 = vector.shape_cast %31 : vector<1x1x128xf32> to vector<1x128xf32>
    %33 = vector.shape_cast %30 : vector<1x128xf32> to vector<1x1x128xf32>
    tpu.vector_store %arg6[%c0_18, %c0_19, %c0_20], %33 {strides = array<i32>} : memref<1x1x128xf32, #tpu.memory_space<vmem>>, vector<1x1x128xf32>,
    return
  }
  func.func @transform_0(%arg0: i32) -> (i32, i32, i32) {
    %c0_i32 = arith.constant 0 : i32
    %c0_i32_0 = arith.constant 0 : i32
    %c0_i32_1 = arith.constant 0 : i32
    return %arg0, %c0_i32, %c0_i32_0 : i32, i32, i32
  }
  func.func @transform_1(%arg0: i32) -> (i32, i32) {
    %c0_i32 = arith.constant 0 : i32
    %c0_i32_0 = arith.constant 0 : i32
    %c0_i32_1 = arith.constant 0 : i32
    return %c0_i32, %c0_i32_0 : i32, i32
  }
  func.func @transform_2(%arg0: i32) -> (i32, i32) {
    %c0_i32 = arith.constant 0 : i32
    %c0_i32_0 = arith.constant 0 : i32
    %c0_i32_1 = arith.constant 0 : i32
    return %c0_i32, %c0_i32_0 : i32, i32
  }
  func.func @transform_3(%arg0: i32) -> (i32, i32) {
    %c0_i32 = arith.constant 0 : i32
    %c0_i32_0 = arith.constant 0 : i32
    %c0_i32_1 = arith.constant 0 : i32
    return %c0_i32, %c0_i32_0 : i32, i32
  }
  func.func @transform_4(%arg0: i32) -> (i32, i32) {
    %c0_i32 = arith.constant 0 : i32
    %c0_i32_0 = arith.constant 0 : i32
    %c0_i32_1 = arith.constant 0 : i32
    return %c0_i32, %c0_i32_0 : i32, i32
  }
  func.func @transform_5(%arg0: i32) -> (i32, i32, i32) {
    %c0_i32 = arith.constant 0 : i32
    %c0_i32_0 = arith.constant 0 : i32
    %c0_i32_1 = arith.constant 0 : i32
    return %arg0, %c0_i32, %c0_i32_0 : i32, i32, i32
  }
}

module attributes {stable_mosaic.version = 11 : i64} {
  func.func @_conv3_se_tail_kernel(%arg0: i32, %arg1: memref<1x16x128xbf16, #tpu.memory_space<vmem>>, %arg2: memref<1x16x128xbf16, #tpu.memory_space<vmem>>, %arg3: memref<128x128xbf16, #tpu.memory_space<vmem>>, %arg4: memref<1x128xf32, #tpu.memory_space<vmem>>, %arg5: memref<128x128xbf16, #tpu.memory_space<vmem>>, %arg6: memref<1x128xf32, #tpu.memory_space<vmem>>, %arg7: memref<128x128xbf16, #tpu.memory_space<vmem>>, %arg8: memref<1x128xf32, #tpu.memory_space<vmem>>, %arg9: memref<128x128xbf16, #tpu.memory_space<vmem>>, %arg10: memref<1x128xf32, #tpu.memory_space<vmem>>, %arg11: memref<1x16x128xbf16, #tpu.memory_space<vmem>>) attributes {dimension_semantics = [#tpu.dimension_semantics<parallel>], iteration_bounds = array<i64: 2>, scalar_prefetch = 0 : i64, scratch_operands = 0 : i64, tpu.core_type = #tpu.core_type<tc>, window_params = [{transform_indices = @transform_0, window_bounds = array<i64: 1, 16, 128>}, {transform_indices = @transform_1, window_bounds = array<i64: 1, 16, 128>}, {pipeline_mode = #tpu.pipeline_mode<synchronous>, transform_indices = @transform_2, window_bounds = array<i64: 128, 128>}, {pipeline_mode = #tpu.pipeline_mode<synchronous>, transform_indices = @transform_3, window_bounds = array<i64: 1, 128>}, {pipeline_mode = #tpu.pipeline_mode<synchronous>, transform_indices = @transform_4, window_bounds = array<i64: 128, 128>}, {pipeline_mode = #tpu.pipeline_mode<synchronous>, transform_indices = @transform_5, window_bounds = array<i64: 1, 128>}, {pipeline_mode = #tpu.pipeline_mode<synchronous>, transform_indices = @transform_6, window_bounds = array<i64: 128, 128>}, {pipeline_mode = #tpu.pipeline_mode<synchronous>, transform_indices = @transform_7, window_bounds = array<i64: 1, 128>}, {pipeline_mode = #tpu.pipeline_mode<synchronous>, transform_indices = @transform_8, window_bounds = array<i64: 128, 128>}, {pipeline_mode = #tpu.pipeline_mode<synchronous>, transform_indices = @transform_9, window_bounds = array<i64: 1, 128>}, {transform_indices = @transform_10, window_bounds = array<i64: 1, 16, 128>}]} {
    %c0 = arith.constant 0 : index
    %c0_0 = arith.constant 0 : index
    %c0_1 = arith.constant 0 : index
    %0 = vector.load %arg1[%c0, %c0_0, %c0_1] : memref<1x16x128xbf16, #tpu.memory_space<vmem>>, vector<1x16x128xbf16>
    %1 = vector.shape_cast %0 : vector<1x16x128xbf16> to vector<16x128xbf16>
    %c0_2 = arith.constant 0 : index
    %c0_3 = arith.constant 0 : index
    %2 = vector.load %arg3[%c0_2, %c0_3] : memref<128x128xbf16, #tpu.memory_space<vmem>>, vector<128x128xbf16>
    %cst = arith.constant dense<0.000000e+00> : vector<16x128xf32>
    %3 = tpu.matmul %1, %2, %cst {dimension_numbers = #tpu.dot_dimension_numbers<[1], [0], [0], [1], [0, 0, 1, 1], [], []>} : vector<16x128xbf16>, vector<128x128xbf16>, vector<16x128xf32> -> vector<16x128xf32>
    %c0_4 = arith.constant 0 : index
    %c0_5 = arith.constant 0 : index
    %4 = vector.load %arg4[%c0_4, %c0_5] : memref<1x128xf32, #tpu.memory_space<vmem>>, vector<1x128xf32>
    %5 = vector.broadcast %4 : vector<1x128xf32> to vector<16x128xf32>
    %6 = arith.addf %3, %5 : vector<16x128xf32>
    %cst_6 = arith.constant dense<0.000000e+00> : vector<128xf32>
    %7 = vector.multi_reduction <add>, %6, %cst_6 [0] : vector<16x128xf32> to vector<128xf32>
    %8 = vector.shape_cast %7 : vector<128xf32> to vector<1x128xf32>
    %cst_7 = arith.constant 1.600000e+01 : f32
    %9 = vector.broadcast %cst_7 : f32 to vector<1x128xf32>
    %10 = arith.divf %8, %9 : vector<1x128xf32>
    %11 = arith.truncf %10 : vector<1x128xf32> to vector<1x128xbf16>
    %c0_8 = arith.constant 0 : index
    %c0_9 = arith.constant 0 : index
    %12 = vector.load %arg7[%c0_8, %c0_9] : memref<128x128xbf16, #tpu.memory_space<vmem>>, vector<128x128xbf16>
    %cst_10 = arith.constant dense<0.000000e+00> : vector<1x128xf32>
    %13 = tpu.matmul %11, %12, %cst_10 {dimension_numbers = #tpu.dot_dimension_numbers<[1], [0], [0], [1], [0, 0, 1, 1], [], []>} : vector<1x128xbf16>, vector<128x128xbf16>, vector<1x128xf32> -> vector<1x128xf32>
    %c0_11 = arith.constant 0 : index
    %c0_12 = arith.constant 0 : index
    %14 = vector.load %arg8[%c0_11, %c0_12] : memref<1x128xf32, #tpu.memory_space<vmem>>, vector<1x128xf32>
    %15 = arith.addf %13, %14 : vector<1x128xf32>
    %cst_13 = arith.constant 0.000000e+00 : f32
    %16 = vector.broadcast %cst_13 : f32 to vector<1x128xf32>
    %17 = arith.maximumf %15, %16 : vector<1x128xf32>
    %18 = arith.truncf %17 : vector<1x128xf32> to vector<1x128xbf16>
    %c0_14 = arith.constant 0 : index
    %c0_15 = arith.constant 0 : index
    %19 = vector.load %arg9[%c0_14, %c0_15] : memref<128x128xbf16, #tpu.memory_space<vmem>>, vector<128x128xbf16>
    %cst_16 = arith.constant dense<0.000000e+00> : vector<1x128xf32>
    %20 = tpu.matmul %18, %19, %cst_16 {dimension_numbers = #tpu.dot_dimension_numbers<[1], [0], [0], [1], [0, 0, 1, 1], [], []>} : vector<1x128xbf16>, vector<128x128xbf16>, vector<1x128xf32> -> vector<1x128xf32>
    %c0_17 = arith.constant 0 : index
    %c0_18 = arith.constant 0 : index
    %21 = vector.load %arg10[%c0_17, %c0_18] : memref<1x128xf32, #tpu.memory_space<vmem>>, vector<1x128xf32>
    %22 = arith.addf %20, %21 : vector<1x128xf32>
    %23 = arith.negf %22 : vector<1x128xf32>
    %24 = math.exp %23 : vector<1x128xf32>
    %cst_19 = arith.constant 1.000000e+00 : f32
    %25 = vector.broadcast %cst_19 : f32 to vector<1x128xf32>
    %26 = arith.addf %25, %24 : vector<1x128xf32>
    %27 = arith.divf %25, %26 : vector<1x128xf32>
    %c0_20 = arith.constant 0 : index
    %c0_21 = arith.constant 0 : index
    %c0_22 = arith.constant 0 : index
    %28 = vector.load %arg2[%c0_20, %c0_21, %c0_22] : memref<1x16x128xbf16, #tpu.memory_space<vmem>>, vector<1x16x128xbf16>
    %29 = vector.shape_cast %28 : vector<1x16x128xbf16> to vector<16x128xbf16>
    %c0_23 = arith.constant 0 : index
    %c0_24 = arith.constant 0 : index
    %30 = vector.load %arg5[%c0_23, %c0_24] : memref<128x128xbf16, #tpu.memory_space<vmem>>, vector<128x128xbf16>
    %cst_25 = arith.constant dense<0.000000e+00> : vector<16x128xf32>
    %31 = tpu.matmul %29, %30, %cst_25 {dimension_numbers = #tpu.dot_dimension_numbers<[1], [0], [0], [1], [0, 0, 1, 1], [], []>} : vector<16x128xbf16>, vector<128x128xbf16>, vector<16x128xf32> -> vector<16x128xf32>
    %c0_26 = arith.constant 0 : index
    %c0_27 = arith.constant 0 : index
    %32 = vector.load %arg6[%c0_26, %c0_27] : memref<1x128xf32, #tpu.memory_space<vmem>>, vector<1x128xf32>
    %33 = vector.broadcast %32 : vector<1x128xf32> to vector<16x128xf32>
    %34 = arith.addf %31, %33 : vector<16x128xf32>
    %35 = vector.broadcast %27 : vector<1x128xf32> to vector<16x128xf32>
    %36 = arith.mulf %6, %35 : vector<16x128xf32>
    %cst_28 = arith.constant 4.000000e-01 : f32
    %37 = vector.broadcast %cst_28 : f32 to vector<16x128xf32>
    %38 = arith.mulf %36, %37 : vector<16x128xf32>
    %39 = arith.addf %38, %34 : vector<16x128xf32>
    %40 = arith.truncf %39 : vector<16x128xf32> to vector<16x128xbf16>
    %c0_29 = arith.constant 0 : index
    %c0_30 = arith.constant 0 : index
    %c0_31 = arith.constant 0 : index
    %41 = vector.load %arg11[%c0_29, %c0_30, %c0_31] : memref<1x16x128xbf16, #tpu.memory_space<vmem>>, vector<1x16x128xbf16>
    %42 = vector.shape_cast %41 : vector<1x16x128xbf16> to vector<16x128xbf16>
    %43 = vector.shape_cast %40 : vector<16x128xbf16> to vector<1x16x128xbf16>
    tpu.vector_store %arg11[%c0_29, %c0_30, %c0_31], %43 {strides = array<i32>} : memref<1x16x128xbf16, #tpu.memory_space<vmem>>, vector<1x16x128xbf16>,
    return
  }
  func.func @transform_0(%arg0: i32) -> (i32, i32, i32) {
    %c0_i32 = arith.constant 0 : i32
    %c0_i32_0 = arith.constant 0 : i32
    %c0_i32_1 = arith.constant 0 : i32
    return %arg0, %c0_i32, %c0_i32_0 : i32, i32, i32
  }
  func.func @transform_1(%arg0: i32) -> (i32, i32, i32) {
    %c0_i32 = arith.constant 0 : i32
    %c0_i32_0 = arith.constant 0 : i32
    %c0_i32_1 = arith.constant 0 : i32
    return %arg0, %c0_i32, %c0_i32_0 : i32, i32, i32
  }
  func.func @transform_2(%arg0: i32) -> (i32, i32) {
    %c0_i32 = arith.constant 0 : i32
    %c0_i32_0 = arith.constant 0 : i32
    %c0_i32_1 = arith.constant 0 : i32
    return %c0_i32, %c0_i32_0 : i32, i32
  }
  func.func @transform_3(%arg0: i32) -> (i32, i32) {
    %c0_i32 = arith.constant 0 : i32
    %c0_i32_0 = arith.constant 0 : i32
    %c0_i32_1 = arith.constant 0 : i32
    return %c0_i32, %c0_i32_0 : i32, i32
  }
  func.func @transform_4(%arg0: i32) -> (i32, i32) {
    %c0_i32 = arith.constant 0 : i32
    %c0_i32_0 = arith.constant 0 : i32
    %c0_i32_1 = arith.constant 0 : i32
    return %c0_i32, %c0_i32_0 : i32, i32
  }
  func.func @transform_5(%arg0: i32) -> (i32, i32) {
    %c0_i32 = arith.constant 0 : i32
    %c0_i32_0 = arith.constant 0 : i32
    %c0_i32_1 = arith.constant 0 : i32
    return %c0_i32, %c0_i32_0 : i32, i32
  }
  func.func @transform_6(%arg0: i32) -> (i32, i32) {
    %c0_i32 = arith.constant 0 : i32
    %c0_i32_0 = arith.constant 0 : i32
    %c0_i32_1 = arith.constant 0 : i32
    return %c0_i32, %c0_i32_0 : i32, i32
  }
  func.func @transform_7(%arg0: i32) -> (i32, i32) {
    %c0_i32 = arith.constant 0 : i32
    %c0_i32_0 = arith.constant 0 : i32
    %c0_i32_1 = arith.constant 0 : i32
    return %c0_i32, %c0_i32_0 : i32, i32
  }
  func.func @transform_8(%arg0: i32) -> (i32, i32) {
    %c0_i32 = arith.constant 0 : i32
    %c0_i32_0 = arith.constant 0 : i32
    %c0_i32_1 = arith.constant 0 : i32
    return %c0_i32, %c0_i32_0 : i32, i32
  }
  func.func @transform_9(%arg0: i32) -> (i32, i32) {
    %c0_i32 = arith.constant 0 : i32
    %c0_i32_0 = arith.constant 0 : i32
    %c0_i32_1 = arith.constant 0 : i32
    return %c0_i32, %c0_i32_0 : i32, i32
  }
  func.func @transform_10(%arg0: i32) -> (i32, i32, i32) {
    %c0_i32 = arith.constant 0 : i32
    %c0_i32_0 = arith.constant 0 : i32
    %c0_i32_1 = arith.constant 0 : i32
    return %arg0, %c0_i32, %c0_i32_0 : i32, i32, i32
  }
}

</mosaic_0001>

<llo_original>
// kernel: nfnet_forward.4
$region0: #{nfnet_forward.4}
  #allocation0 [shape = 'u32[]', space=smem, size = 0x4, offset = 0x4, fixed_abs, tag = 'smem constant byte address 0x4 - core index']
  #allocation1 [shape = 'u32[144,128]{1,0:T(1,128)}', space=vmem, size = 0x12000, scoped, tag = 'internal scratch']
  %s0 = inlined_call_operand.vmem [shape: bf16[128,27], index: 0, kind: input, shape index: {}]
  %s1 = inlined_call_operand.vmem [shape: bf16[27,128], index: 1, kind: input, shape index: {}]
  %s2 = inlined_call_operand.vmem [shape: f32[1,128], index: 2, kind: input, shape index: {}]
  %s3 = inlined_call_operand.vmem [shape: bf16[128,128], index: 3, kind: input, shape index: {}]
  %s4 = inlined_call_operand.vmem [shape: f32[1,128], index: 4, kind: input, shape index: {}]
  %s5 = inlined_call_operand.vmem [shape: bf16[128,128], index: 5, kind: output, shape index: {0}]
  %s6 = inlined_call_operand.vmem [shape: bf16[128,128], index: 6, kind: output, shape index: {1}]
  %7 = xla_tuple %s5, %s6
  %s8 = sld [smem:[#allocation0]]
  $region61: #{nfnet_forward.4} parent=0
    _
  %s10 = ssub.s32 1, %s8
  %s11 = scalar_select 0, %s10, %s8
  loop: start=0, step=1, limit=4
  $region2: #{nfnet_forward.4} parent=0 // loop_pre_header
    _
  $region3: #{nfnet_forward.4} parent=0 // loop_header
    %s13 = sphi 0, %s17
    %p14 = scmp.ge.s32.totalorder %s13, 4
    %s23 = sphi 0, %s25
    %s26 = sphi 0, %s23
    %s27 = sphi 0, %s26
    %s43 = sphi 0, %s27
    %s47 = sphi 0, %s47
    %s49 = sphi 0, %s47
    %s50 = sphi 0, %s49
    %s64 = sphi 0, %s50
    %s68 = sphi 0, %s68
    %s70 = sphi 0, %s68
    %s71 = sphi 0, %s70
    %s85 = sphi 0, %s71
    %s89 = sphi 0, %s89
    %s91 = sphi 0, %s89
    %s92 = sphi 0, %s91
    %s106 = sphi 0, %s92
    %s110 = sphi 0, %s110
    %s112 = sphi 0, %s110
    %s113 = sphi 0, %s112
    %s127 = sphi 0, %s113
    %s133 = sphi 0, %s135
    %s136 = sphi 0, %s133
    %s137 = sphi 0, %s136
    %s153 = sphi 0, %s137
    %s159 = sphi 0, %s161
    %s162 = sphi 0, %s159
    %s163 = sphi 0, %s162
    %s179 = sphi 0, %s163
  $region4: #{nfnet_forward.4} parent=0 // loop_header_branch
    %16 = sbr.rel (%p14) target = $region8
  $region5: #{nfnet_forward.4} parent=0 // loop_body
    %s18 = ssub.s32 %s13, 1
    %s19 = ssub.s32 %s13, 2
    %s20 = sadd.s32 %s13, 1
    %s21 = ssub.s32 %s13, %s20
    %p22 = scmp.eq.s32.totalorder %s21, 0
    %s24 = sadd.s32 %s23, 1
    %s25 = scalar_select %p22, %s23, %s24
    %p28 = pneg %p22
    %p29 = scmp.eq.s32.totalorder %s13, 1
    %p30 = por %p28, %p29
    %p31 = scmp.ne.s32.totalorder %s23, %s26
    %p32 = scmp.eq.s32.totalorder %s13, 0
    %p33 = por %p31, %p32
    %p34 = scmp.ne.s32.totalorder %s23, %s26
    %p35 = scmp.eq.s32.totalorder %s18, 1
    %p36 = por %p34, %p35
    %p37 = scmp.ne.s32.totalorder %s26, %s27
    %p38 = scmp.eq.s32.totalorder %s18, 0
    %p39 = por %p37, %p38
    %p40 = scmp.ne.s32.totalorder %s26, %s27
    %p41 = scmp.eq.s32.totalorder %s19, 1
    %p42 = por %p40, %p41
    %p44 = scmp.ne.s32.totalorder %s27, %s43
    %p45 = scmp.eq.s32.totalorder %s19, 0
    %p46 = por %p44, %p45
    %s48 = sadd.s32 %s47, 1
    %p51 = scmp.eq.s32.totalorder %s13, 1
    %p52 = scmp.ne.s32.totalorder %s47, %s49
    %p53 = scmp.eq.s32.totalorder %s13, 0
    %p54 = por %p52, %p53
    %p55 = scmp.ne.s32.totalorder %s47, %s49
    %p56 = scmp.eq.s32.totalorder %s18, 1
    %p57 = por %p55, %p56
    %p58 = scmp.ne.s32.totalorder %s49, %s50
    %p59 = scmp.eq.s32.totalorder %s18, 0
    %p60 = por %p58, %p59
    %p61 = scmp.ne.s32.totalorder %s49, %s50
    %p62 = scmp.eq.s32.totalorder %s19, 1
    %p63 = por %p61, %p62
    %p65 = scmp.ne.s32.totalorder %s50, %s64
    %p66 = scmp.eq.s32.totalorder %s19, 0
    %p67 = por %p65, %p66
    %s69 = sadd.s32 %s68, 1
    %p72 = scmp.eq.s32.totalorder %s13, 1
    %p73 = scmp.ne.s32.totalorder %s68, %s70
    %p74 = scmp.eq.s32.totalorder %s13, 0
    %p75 = por %p73, %p74
    %p76 = scmp.ne.s32.totalorder %s68, %s70
    %p77 = scmp.eq.s32.totalorder %s18, 1
    %p78 = por %p76, %p77
    %p79 = scmp.ne.s32.totalorder %s70, %s71
    %p80 = scmp.eq.s32.totalorder %s18, 0
    %p81 = por %p79, %p80
    %p82 = scmp.ne.s32.totalorder %s70, %s71
    %p83 = scmp.eq.s32.totalorder %s19, 1
    %p84 = por %p82, %p83
    %p86 = scmp.ne.s32.totalorder %s71, %s85
    %p87 = scmp.eq.s32.totalorder %s19, 0
    %p88 = por %p86, %p87
    %s90 = sadd.s32 %s89, 1
    %p93 = scmp.eq.s32.totalorder %s13, 1
    %p94 = scmp.ne.s32.totalorder %s89, %s91
    %p95 = scmp.eq.s32.totalorder %s13, 0
    %p96 = por %p94, %p95
    %p97 = scmp.ne.s32.totalorder %s89, %s91
    %p98 = scmp.eq.s32.totalorder %s18, 1
    %p99 = por %p97, %p98
    %p100 = scmp.ne.s32.totalorder %s91, %s92
    %p101 = scmp.eq.s32.totalorder %s18, 0
    %p102 = por %p100, %p101
    %p103 = scmp.ne.s32.totalorder %s91, %s92
    %p104 = scmp.eq.s32.totalorder %s19, 1
    %p105 = por %p103, %p104
    %p107 = scmp.ne.s32.totalorder %s92, %s106
    %p108 = scmp.eq.s32.totalorder %s19, 0
    %p109 = por %p107, %p108
    %s111 = sadd.s32 %s110, 1
    %p114 = scmp.eq.s32.totalorder %s13, 1
    %p115 = scmp.ne.s32.totalorder %s110, %s112
    %p116 = scmp.eq.s32.totalorder %s13, 0
    %p117 = por %p115, %p116
    %p118 = scmp.ne.s32.totalorder %s110, %s112
    %p119 = scmp.eq.s32.totalorder %s18, 1
    %p120 = por %p118, %p119
    %p121 = scmp.ne.s32.totalorder %s112, %s113
    %p122 = scmp.eq.s32.totalorder %s18, 0
    %p123 = por %p121, %p122
    %p124 = scmp.ne.s32.totalorder %s112, %s113
    %p125 = scmp.eq.s32.totalorder %s19, 1
    %p126 = por %p124, %p125
    %p128 = scmp.ne.s32.totalorder %s113, %s127
    %p129 = scmp.eq.s32.totalorder %s19, 0
    %p130 = por %p128, %p129
    %s131 = ssub.s32 %s13, %s20
    %p132 = scmp.eq.s32.totalorder %s131, 0
    %s134 = sadd.s32 %s133, 1
    %s135 = scalar_select %p132, %s133, %s134
    %p138 = pneg %p132
    %p139 = scmp.eq.s32.totalorder %s13, 1
    %p140 = por %p138, %p139
    %p141 = scmp.ne.s32.totalorder %s133, %s136
    %p142 = scmp.eq.s32.totalorder %s13, 0
    %p143 = por %p141, %p142
    %p144 = scmp.ne.s32.totalorder %s133, %s136
    %p145 = scmp.eq.s32.totalorder %s18, 1
    %p146 = por %p144, %p145
    %p147 = scmp.ne.s32.totalorder %s136, %s137
    %p148 = scmp.eq.s32.totalorder %s18, 0
    %p149 = por %p147, %p148
    %p150 = scmp.ne.s32.totalorder %s136, %s137
    %p151 = scmp.eq.s32.totalorder %s19, 1
    %p152 = por %p150, %p151
    %p154 = scmp.ne.s32.totalorder %s137, %s153
    %p155 = scmp.eq.s32.totalorder %s19, 0
    %p156 = por %p154, %p155
    %s157 = ssub.s32 %s13, %s20
    %p158 = scmp.eq.s32.totalorder %s157, 0
    %s160 = sadd.s32 %s159, 1
    %s161 = scalar_select %p158, %s159, %s160
    %p164 = pneg %p158
    %p165 = scmp.eq.s32.totalorder %s13, 1
    %p166 = por %p164, %p165
    %p167 = scmp.ne.s32.totalorder %s159, %s162
    %p168 = scmp.eq.s32.totalorder %s13, 0
    %p169 = por %p167, %p168
    %p170 = scmp.ne.s32.totalorder %s159, %s162
    %p171 = scmp.eq.s32.totalorder %s18, 1
    %p172 = por %p170, %p171
    %p173 = scmp.ne.s32.totalorder %s162, %s163
    %p174 = scmp.eq.s32.totalorder %s18, 0
    %p175 = por %p173, %p174
    %p176 = scmp.ne.s32.totalorder %s162, %s163
    %p177 = scmp.eq.s32.totalorder %s19, 1
    %p178 = por %p176, %p177
    %p180 = scmp.ne.s32.totalorder %s163, %s179
    %p181 = scmp.eq.s32.totalorder %s19, 0
    %p182 = por %p180, %p181
    %p183 = scmp.le.s32.totalorder 1, %s13
    %p184 = scmp.lt.s32.totalorder %s13, 3
    %p185 = pnand %p183, %p184
    %p186 = pneg %p185
    // Predicated region
    $region9: #{nfnet_forward.4} parent=5 // pred_check
      _
    $region10: #{nfnet_forward.4} parent=5 // pred_check_branch
      %188 = sbr.rel (%p185) target = $region12
    $region11: #{nfnet_forward.4} parent=5 // pred_region
      %s189 = ssub.s32 %s13, 1
      // Predicated region
      $region13: #{nfnet_forward.4} parent=11 // pred_check
        %p190 = pneg %p60
      $region14: #{nfnet_forward.4} parent=11 // pred_check_branch
        %192 = sbr.rel (%p190) target = $region16
      $region15: #{nfnet_forward.4} parent=11 // pred_region
        _
      $region16: #{nfnet_forward.4} parent=11 // pred_fallthru
        _
      // Predicated region
      $region17: #{nfnet_forward.4} parent=11 // pred_check
        %p193 = pneg %p81
      $region18: #{nfnet_forward.4} parent=11 // pred_check_branch
        %195 = sbr.rel (%p193) target = $region20
      $region19: #{nfnet_forward.4} parent=11 // pred_region
        _
      $region20: #{nfnet_forward.4} parent=11 // pred_fallthru
        _
      // Predicated region
      $region21: #{nfnet_forward.4} parent=11 // pred_check
        %p196 = pneg %p102
      $region22: #{nfnet_forward.4} parent=11 // pred_check_branch
        %198 = sbr.rel (%p196) target = $region24
      $region23: #{nfnet_forward.4} parent=11 // pred_region
        _
      $region24: #{nfnet_forward.4} parent=11 // pred_fallthru
        _
      // Predicated region
      $region25: #{nfnet_forward.4} parent=11 // pred_check
        %p199 = pneg %p123
      $region26: #{nfnet_forward.4} parent=11 // pred_check_branch
        %201 = sbr.rel (%p199) target = $region28
      $region27: #{nfnet_forward.4} parent=11 // pred_region
        _
      $region28: #{nfnet_forward.4} parent=11 // pred_fallthru
        _
    $region12: #{nfnet_forward.4} parent=5 // pred_fallthru
      _
    %p202 = scmp.lt.s32.totalorder %s13, 2
    // Predicated region
    $region29: #{nfnet_forward.4} parent=5 // pred_check
      %p203 = pneg %p202
    $region30: #{nfnet_forward.4} parent=5 // pred_check_branch
      %205 = sbr.rel (%p203) target = $region32
    $region31: #{nfnet_forward.4} parent=5 // pred_region
      // Predicated region
      $region33: #{nfnet_forward.4} parent=31 // pred_check
        %p206 = pneg %p33
      $region34: #{nfnet_forward.4} parent=31 // pred_check_branch
        %208 = sbr.rel (%p206) target = $region36
      $region35: #{nfnet_forward.4} parent=31 // pred_region
        %s209 = smul.u32 8, %s13
        %p210 = scmp.lt.s32.totalorder %s209, 15
        %s211 = scalar_select %p210, %s209, 15
        %s212 = smul.addr %s211, 4
        %s213 = scalar_lea.vmem %s0, %s212
        %s214 = smul.u32 8, %s13
      $region36: #{nfnet_forward.4} parent=31 // pred_fallthru
        _
    $region32: #{nfnet_forward.4} parent=5 // pred_fallthru
      _
    %p215 = scmp.le.s32.totalorder 1, %s13
    %p216 = scmp.lt.s32.totalorder %s13, 3
    %p217 = pnand %p215, %p216
    %p218 = pneg %p217
    // Predicated region
    $region37: #{nfnet_forward.4} parent=5 // pred_check
      _
    $region38: #{nfnet_forward.4} parent=5 // pred_check_branch
      %220 = sbr.rel (%p217) target = $region40
    $region39: #{nfnet_forward.4} parent=5 // pred_region
      %s221 = ssub.s32 %s13, 1
      %s222 = smul.u32 8, %s18
      %p223 = scmp.lt.s32.totalorder %s222, 15
      %s224 = scalar_select %p223, %s222, 15
      %s225 = smul.addr %s224, 4
      %s226 = scalar_lea.vmem %s0, %s225
      %p227 = pneg %p39
      %p228 = pneg %p36
      %p229 = pneg %p60
      %p230 = pneg %p57
      %p231 = pneg %p81
      %p232 = pneg %p78
      %p233 = pneg %p102
      %p234 = pneg %p99
      %p235 = pneg %p123
      %p236 = pneg %p120
      %p237 = pneg %p149
      %p238 = pneg %p146
      %s239 = smul.u32 8, %s18
      %p240 = scmp.lt.s32.totalorder %s239, 15
      %s241 = scalar_select %p240, %s239, 15
      %s242 = smul.addr %s241, 4
      %s243 = scalar_lea.vmem %s5, %s242
      %p244 = pneg %p175
      %p245 = pneg %p172
      %s246 = smul.u32 8, %s18
      %p247 = scmp.lt.s32.totalorder %s246, 15
      %s248 = scalar_select %p247, %s246, 15
      %s249 = smul.addr %s248, 4
      %s250 = scalar_lea.vmem %s6, %s249
      %s251 = smul.u32 8, %s18
      %p252 = scmp.lt.s32.totalorder %s251, 15
      %s253 = scalar_select %p252, %s251, 15
      %s254 = smul.addr %s253, 4
      %s255 = scalar_lea.vmem %s0, %s254
      %s256 = smul.u32 8, %s18
      %s257 = smul.u32 8, %s18
      %p258 = scmp.lt.s32.totalorder %s257, 15
      %s259 = scalar_select %p258, %s257, 15
      %s260 = smul.addr %s259, 4
      %s261 = scalar_lea.vmem %s5, %s260
      %s262 = smul.u32 8, %s18
      %s263 = smul.u32 8, %s18
      %p264 = scmp.lt.s32.totalorder %s263, 15
      %s265 = scalar_select %p264, %s263, 15
      %s266 = smul.addr %s265, 4
      %s267 = scalar_lea.vmem %s6, %s266
      %s268 = smul.u32 8, %s18
      %v270 = vld [vmem:[%s255] sm:$0xf]
      %v271 = vld [vmem:[%s255 + $0x4] sm:$0xf]
      %v272 = vld [vmem:[%s255 + $0x8] sm:$0xf]
      %v273 = vld [vmem:[%s255 + $0xc] sm:$0xf]
      %v274 = vld [vmem:[%s255 + $0x10] sm:$0xf]
      %v275 = vld [vmem:[%s255 + $0x14] sm:$0xf]
      %v276 = vld [vmem:[%s255 + $0x18] sm:$0xf]
      %v277 = vld [vmem:[%s255 + $0x1c] sm:$0xf]
      %v278 = vld [vmem:[%s1] sm:$0xf]
      %v279 = vld [vmem:[%s1 + $0x4] sm:$0xf]
      %v280 = vld [vmem:[%s1 + $0x8] sm:$0xf]
      %v281 = vld [vmem:[%s1 + $0xc] sm:$0x3]
      %v282 = vld [vmem:[%s2] sm:$0x1]
      %v284 = vlaneseq
      %v285 = vshrl.u32 %v284, 7
      %v286 = vsub.s32 0, %v285
      %v287 = vrot.slane %v282, %v286
      %v297 = vunpack.c.l.b16 %v270
      %v298 = vunpack.c.l.b16 %v271
      %v299 = vunpack.c.l.b16 %v272
      %v300 = vunpack.c.l.b16 %v273
      %v301 = vunpack.c.l.b16 %v274
      %v302 = vunpack.c.l.b16 %v275
      %v303 = vunpack.c.l.b16 %v276
      %v304 = vunpack.c.l.b16 %v277
      %v305 = vpack.c.b16 %v298, %v297
      %v306 = vpack.c.b16 %v300, %v299
      %v307 = vpack.c.b16 %v302, %v301
      %v308 = vpack.c.b16 %v304, %v303
      %v313 = vunpack.c.l.b16 %v278
      %v314 = vunpack.c.l.b16 %v279
      %v315 = vunpack.c.l.b16 %v280
      %v316 = vunpack.c.l.b16 %v281
      %v317 = vpack.c.b16 %v314, %v313
      %v318 = vpack.c.b16 %v316, %v315
      %vm320 = vcmask 220160
      %v322 = vsel %vm320, %v305, 0
      %v325 = vsel %vm320, %v306, 0
      %v328 = vsel %vm320, %v307, 0
      %v331 = vsel %vm320, %v308, 0
      %vm333 = vcmask 1044480
      %vm334 = vcmask 1045504
      %v335 = vsel %vm333, 4294967295, 65535
      %v336 = vsel %vm334, %v335, 0
      %v338 = vand.u32 %v318, %v336
      %340 = vmatprep.subr.bf16.mxu0 0
      %341 = vmatpush1.bf16.msra.mxu0 %v317
      %342 = vmatprep.subr.bf16.mxu0 0
      %343 = vmatpush1.bf16.msra.mxu0 %v338
      %344 = vmatprep.subr.bf16.mxu0 0
      %345 = vmatpush1.bf16.msra.mxu0 0
      %346 = vmatprep.subr.bf16.mxu0 0
      %347 = vmatpush1.bf16.msra.mxu0 0
      %348 = vmatprep.subr.bf16.mxu0 0
      %349 = vmatpush1.bf16.msra.mxu0 0
      %350 = vmatprep.subr.bf16.mxu0 0
      %351 = vmatpush1.bf16.msra.mxu0 0
      %352 = vmatprep.subr.bf16.mxu0 0
      %353 = vmatpush1.bf16.msra.mxu0 0
      %354 = vmatprep.subr.bf16.mxu0 0
      %355 = vmatpush1.bf16.msra.mxu0 0
      %356 = vmatprep.subr.bf16.mxu0 0
      %357 = vmatpush1.bf16.msra.mxu0 0
      %358 = vmatprep.subr.bf16.mxu0 0
      %359 = vmatpush1.bf16.msra.mxu0 0
      %360 = vmatprep.subr.bf16.mxu0 0
      %361 = vmatpush1.bf16.msra.mxu0 0
      %362 = vmatprep.subr.bf16.mxu0 0
      %363 = vmatpush1.bf16.msra.mxu0 0
      %364 = vmatprep.subr.bf16.mxu0 0
      %365 = vmatpush1.bf16.msra.mxu0 0
      %366 = vmatprep.subr.bf16.mxu0 0
      %367 = vmatpush1.bf16.msra.mxu0 0
      %368 = vmatprep.subr.bf16.mxu0 0
      %369 = vmatpush1.bf16.msra.mxu0 0
      %370 = vmatprep.subr.bf16.mxu0 0
      %371 = vmatpush1.bf16.msra.mxu0 0
      %372 = vmatprep.mubr.bf16.mxu0 0
      %373 = vmatmul.mubr.bf16.gmra.mrb[0].mxu0 %v322
      %v374 = vpop.f32.mrb[0].mxu0
      %v375 = vadd.f32 %v287, %v374
      %v376 = vpop.f32.mrb[0].mxu0
      %v377 = vpop.f32.mrb[0].mxu0
      %v378 = vadd.f32 %v287, %v377
      %v379 = vpop.f32.mrb[0].mxu0
      %380 = vmatprep.mubr.bf16.mxu0 0
      %381 = vmatmul.mubr.bf16.gmra.mrb[0].mxu0 %v325
      %v382 = vpop.f32.mrb[0].mxu0
      %v383 = vadd.f32 %v287, %v382
      %v384 = vpop.f32.mrb[0].mxu0
      %v385 = vpop.f32.mrb[0].mxu0
      %v386 = vadd.f32 %v287, %v385
      %v387 = vpop.f32.mrb[0].mxu0
      %388 = vmatprep.mubr.bf16.mxu0 0
      %389 = vmatmul.mubr.bf16.gmra.mrb[0].mxu0 %v328
      %v390 = vpop.f32.mrb[0].mxu0
      %v391 = vadd.f32 %v287, %v390
      %v392 = vpop.f32.mrb[0].mxu0
      %v393 = vpop.f32.mrb[0].mxu0
      %v394 = vadd.f32 %v287, %v393
      %v395 = vpop.f32.mrb[0].mxu0
      %396 = vmatprep.mubr.bf16.mxu0 0
      %397 = vmatmul.mubr.bf16.gmra.mrb[0].mxu0 %v331
      %v398 = vpop.f32.mrb[0].mxu0
      %v399 = vadd.f32 %v287, %v398
      %v400 = vpop.f32.mrb[0].mxu0
      %v401 = vpop.f32.mrb[0].mxu0
      %v402 = vadd.f32 %v287, %v401
      %v403 = vpop.f32.mrb[0].mxu0
      %404 = vdwg.mxu0
      %v405 = vmul.f32 %v375, %v375
      %v406 = vmul.f32 %v378, %v378
      %v407 = vmul.f32 %v383, %v383
      %v408 = vmul.f32 %v386, %v386
      %v409 = vmul.f32 %v391, %v391
      %v410 = vmul.f32 %v394, %v394
      %v411 = vmul.f32 %v399, %v399
      %v412 = vmul.f32 %v402, %v402
      %v413 = vmul.f32 %v375, %v405
      %v414 = vmul.f32 %v378, %v406
      %v415 = vmul.f32 %v383, %v407
      %v416 = vmul.f32 %v386, %v408
      %v417 = vmul.f32 %v391, %v409
      %v418 = vmul.f32 %v394, %v410
      %v419 = vmul.f32 %v399, %v411
      %v420 = vmul.f32 %v402, %v412
      %v421 = vmul.f32 %v413, 0.044715
      %v422 = vmul.f32 %v414, 0.044715
      %v423 = vmul.f32 %v415, 0.044715
      %v424 = vmul.f32 %v416, 0.044715
      %v425 = vmul.f32 %v417, 0.044715
      %v426 = vmul.f32 %v418, 0.044715
      %v427 = vmul.f32 %v419, 0.044715
      %v428 = vmul.f32 %v420, 0.044715
      %v429 = vadd.f32 %v375, %v421
      %v430 = vadd.f32 %v378, %v422
      %v431 = vadd.f32 %v383, %v423
      %v432 = vadd.f32 %v386, %v424
      %v433 = vadd.f32 %v391, %v425
      %v434 = vadd.f32 %v394, %v426
      %v435 = vadd.f32 %v399, %v427
      %v436 = vadd.f32 %v402, %v428
      %v437 = vmul.f32 %v429, 0.7978846
      %v438 = vmul.f32 %v430, 0.7978846
      %v439 = vmul.f32 %v431, 0.7978846
      %v440 = vmul.f32 %v432, 0.7978846
      %v441 = vmul.f32 %v433, 0.7978846
      %v442 = vmul.f32 %v434, 0.7978846
      %v443 = vmul.f32 %v435, 0.7978846
      %v444 = vmul.f32 %v436, 0.7978846
      %v445 = vtanh.pop %v437
      %v446 = vtanh.pop %v438
      %v447 = vtanh.pop %v439
      %v448 = vtanh.pop %v440
      %v449 = vtanh.pop %v441
      %v450 = vtanh.pop %v442
      %v451 = vtanh.pop %v443
      %v452 = vtanh.pop %v444
      %v453 = vadd.f32 %v445, 1.0
      %v454 = vadd.f32 %v446, 1.0
      %v455 = vadd.f32 %v447, 1.0
      %v456 = vadd.f32 %v448, 1.0
      %v457 = vadd.f32 %v449, 1.0
      %v458 = vadd.f32 %v450, 1.0
      %v459 = vadd.f32 %v451, 1.0
      %v460 = vadd.f32 %v452, 1.0
      %v461 = vmul.f32 %v453, 0.5
      %v462 = vmul.f32 %v454, 0.5
      %v463 = vmul.f32 %v455, 0.5
      %v464 = vmul.f32 %v456, 0.5
      %v465 = vmul.f32 %v457, 0.5
      %v466 = vmul.f32 %v458, 0.5
      %v467 = vmul.f32 %v459, 0.5
      %v468 = vmul.f32 %v460, 0.5
      %v469 = vmul.f32 %v375, %v461
      %v470 = vmul.f32 %v378, %v462
      %v471 = vmul.f32 %v383, %v463
      %v472 = vmul.f32 %v386, %v464
      %v473 = vmul.f32 %v391, %v465
      %v474 = vmul.f32 %v394, %v466
      %v475 = vmul.f32 %v399, %v467
      %v476 = vmul.f32 %v402, %v468
      %v477 = vmul.f32 %v469, 1.7015043
      %v478 = vmul.f32 %v470, 1.7015043
      %v479 = vmul.f32 %v471, 1.7015043
      %v480 = vmul.f32 %v472, 1.7015043
      %v481 = vmul.f32 %v473, 1.7015043
      %v482 = vmul.f32 %v474, 1.7015043
      %v483 = vmul.f32 %v475, 1.7015043
      %v484 = vmul.f32 %v476, 1.7015043
      %v485 = vpack.c.bf16 %v478, %v477
      %v486 = vpack.c.bf16 %v480, %v479
      %v487 = vpack.c.bf16 %v482, %v481
      %v488 = vpack.c.bf16 %v484, %v483
      %v493 = vunpack.c.l.b16 %v485
      %v494 = vunpack.c.h.b16 %v485
      %v495 = vunpack.c.l.b16 %v486
      %v496 = vunpack.c.h.b16 %v486
      %v497 = vunpack.c.l.b16 %v487
      %v498 = vunpack.c.h.b16 %v487
      %v499 = vunpack.c.l.b16 %v488
      %v500 = vunpack.c.h.b16 %v488
      %v501 = vpack.c.b16 %v493, %v493
      %v502 = vpack.c.b16 %v494, %v494
      %v503 = vpack.c.b16 %v495, %v495
      %v504 = vpack.c.b16 %v496, %v496
      %v505 = vpack.c.b16 %v497, %v497
      %v506 = vpack.c.b16 %v498, %v498
      %v507 = vpack.c.b16 %v499, %v499
      %v508 = vpack.c.b16 %v500, %v500
      %517 = vst [vmem:[%s261] sm:$0xf] %v501
      %518 = vst [vmem:[%s261 + $0x4] sm:$0xf] %v502
      %519 = vst [vmem:[%s261 + $0x8] sm:$0xf] %v503
      %520 = vst [vmem:[%s261 + $0xc] sm:$0xf] %v504
      %521 = vst [vmem:[%s261 + $0x10] sm:$0xf] %v505
      %522 = vst [vmem:[%s261 + $0x14] sm:$0xf] %v506
      %523 = vst [vmem:[%s261 + $0x18] sm:$0xf] %v507
      %524 = vst [vmem:[%s261 + $0x1c] sm:$0xf] %v508
      %v525 = vld [vmem:[%s3] sm:$0xf]
      %v526 = vld [vmem:[%s3 + $0x4] sm:$0xf]
      %v527 = vld [vmem:[%s3 + $0x8] sm:$0xf]
      %v528 = vld [vmem:[%s3 + $0xc] sm:$0xf]
      %v529 = vld [vmem:[%s3 + $0x10] sm:$0xf]
      %v530 = vld [vmem:[%s3 + $0x14] sm:$0xf]
      %v531 = vld [vmem:[%s3 + $0x18] sm:$0xf]
      %v532 = vld [vmem:[%s3 + $0x1c] sm:$0xf]
      %v533 = vld [vmem:[%s3 + $0x20] sm:$0xf]
      %v534 = vld [vmem:[%s3 + $0x24] sm:$0xf]
      %v535 = vld [vmem:[%s3 + $0x28] sm:$0xf]
      %v536 = vld [vmem:[%s3 + $0x2c] sm:$0xf]
      %v537 = vld [vmem:[%s3 + $0x30] sm:$0xf]
      %v538 = vld [vmem:[%s3 + $0x34] sm:$0xf]
      %v539 = vld [vmem:[%s3 + $0x38] sm:$0xf]
      %v540 = vld [vmem:[%s3 + $0x3c] sm:$0xf]
      %v541 = vld [vmem:[%s4] sm:$0x1]
      %v543 = vlaneseq
      %v544 = vshrl.u32 %v543, 7
      %v545 = vsub.s32 0, %v544
      %v546 = vrot.slane %v541, %v545
      %v564 = vunpack.c.l.b16 %v525
      %v565 = vunpack.c.l.b16 %v526
      %v566 = vunpack.c.l.b16 %v527
      %v567 = vunpack.c.l.b16 %v528
      %v568 = vunpack.c.l.b16 %v529
      %v569 = vunpack.c.l.b16 %v530
      %v570 = vunpack.c.l.b16 %v531
      %v571 = vunpack.c.l.b16 %v532
      %v572 = vunpack.c.l.b16 %v533
      %v573 = vunpack.c.l.b16 %v534
      %v574 = vunpack.c.l.b16 %v535
      %v575 = vunpack.c.l.b16 %v536
      %v576 = vunpack.c.l.b16 %v537
      %v577 = vunpack.c.l.b16 %v538
      %v578 = vunpack.c.l.b16 %v539
      %v579 = vunpack.c.l.b16 %v540
      %v580 = vpack.c.b16 %v565, %v564
      %v581 = vpack.c.b16 %v567, %v566
      %v582 = vpack.c.b16 %v569, %v568
      %v583 = vpack.c.b16 %v571, %v570
      %v584 = vpack.c.b16 %v573, %v572
      %v585 = vpack.c.b16 %v575, %v574
      %v586 = vpack.c.b16 %v577, %v576
      %v587 = vpack.c.b16 %v579, %v578
      %596 = vmatprep.subr.bf16.mxu0 0
      %597 = vmatpush1.bf16.msra.mxu0 %v580
      %598 = vmatprep.subr.bf16.mxu0 0
      %599 = vmatpush1.bf16.msra.mxu0 %v581
      %600 = vmatprep.subr.bf16.mxu0 0
      %601 = vmatpush1.bf16.msra.mxu0 %v582
      %602 = vmatprep.subr.bf16.mxu0 0
      %603 = vmatpush1.bf16.msra.mxu0 %v583
      %604 = vmatprep.subr.bf16.mxu0 0
      %605 = vmatpush1.bf16.msra.mxu0 %v584
      %606 = vmatprep.subr.bf16.mxu0 0
      %607 = vmatpush1.bf16.msra.mxu0 %v585
      %608 = vmatprep.subr.bf16.mxu0 0
      %609 = vmatpush1.bf16.msra.mxu0 %v586
      %610 = vmatprep.subr.bf16.mxu0 0
      %611 = vmatpush1.bf16.msra.mxu0 %v587
      %612 = vmatprep.subr.bf16.mxu0 0
      %613 = vmatpush1.bf16.msra.mxu0 0
      %614 = vmatprep.subr.bf16.mxu0 0
      %615 = vmatpush1.bf16.msra.mxu0 0
      %616 = vmatprep.subr.bf16.mxu0 0
      %617 = vmatpush1.bf16.msra.mxu0 0
      %618 = vmatprep.subr.bf16.mxu0 0
      %619 = vmatpush1.bf16.msra.mxu0 0
      %620 = vmatprep.subr.bf16.mxu0 0
      %621 = vmatpush1.bf16.msra.mxu0 0
      %622 = vmatprep.subr.bf16.mxu0 0
      %623 = vmatpush1.bf16.msra.mxu0 0
      %624 = vmatprep.subr.bf16.mxu0 0
      %625 = vmatpush1.bf16.msra.mxu0 0
      %626 = vmatprep.subr.bf16.mxu0 0
      %627 = vmatpush1.bf16.msra.mxu0 0
      %628 = vmatprep.mubr.bf16.mxu0 0
      %629 = vmatmul.mubr.bf16.gmra.mrb[0].mxu0 %v485
      %v630 = vpop.f32.mrb[0].mxu0
      %v631 = vadd.f32 %v546, %v630
      %v632 = vpop.f32.mrb[0].mxu0
      %v633 = vpop.f32.mrb[0].mxu0
      %v634 = vadd.f32 %v546, %v633
      %v635 = vpop.f32.mrb[0].mxu0
      %636 = vmatprep.mubr.bf16.mxu0 0
      %637 = vmatmul.mubr.bf16.gmra.mrb[0].mxu0 %v486
      %v638 = vpop.f32.mrb[0].mxu0
      %v639 = vadd.f32 %v546, %v638
      %v640 = vpop.f32.mrb[0].mxu0
      %v641 = vpop.f32.mrb[0].mxu0
      %v642 = vadd.f32 %v546, %v641
      %v643 = vpop.f32.mrb[0].mxu0
      %644 = vmatprep.mubr.bf16.mxu0 0
      %645 = vmatmul.mubr.bf16.gmra.mrb[0].mxu0 %v487
      %v646 = vpop.f32.mrb[0].mxu0
      %v647 = vadd.f32 %v546, %v646
      %v648 = vpop.f32.mrb[0].mxu0
      %v649 = vpop.f32.mrb[0].mxu0
      %v650 = vadd.f32 %v546, %v649
      %v651 = vpop.f32.mrb[0].mxu0
      %652 = vmatprep.mubr.bf16.mxu0 0
      %653 = vmatmul.mubr.bf16.gmra.mrb[0].mxu0 %v488
      %v654 = vpop.f32.mrb[0].mxu0
      %v655 = vadd.f32 %v546, %v654
      %v656 = vpop.f32.mrb[0].mxu0
      %v657 = vpop.f32.mrb[0].mxu0
      %v658 = vadd.f32 %v546, %v657
      %v659 = vpop.f32.mrb[0].mxu0
      %660 = vdwg.mxu0
      %v661 = vmul.f32 %v631, %v631
      %v662 = vmul.f32 %v634, %v634
      %v663 = vmul.f32 %v639, %v639
      %v664 = vmul.f32 %v642, %v642
      %v665 = vmul.f32 %v647, %v647
      %v666 = vmul.f32 %v650, %v650
      %v667 = vmul.f32 %v655, %v655
      %v668 = vmul.f32 %v658, %v658
      %v669 = vmul.f32 %v631, %v661
      %v670 = vmul.f32 %v634, %v662
      %v671 = vmul.f32 %v639, %v663
      %v672 = vmul.f32 %v642, %v664
      %v673 = vmul.f32 %v647, %v665
      %v674 = vmul.f32 %v650, %v666
      %v675 = vmul.f32 %v655, %v667
      %v676 = vmul.f32 %v658, %v668
      %v677 = vmul.f32 %v669, 0.044715
      %v678 = vmul.f32 %v670, 0.044715
      %v679 = vmul.f32 %v671, 0.044715
      %v680 = vmul.f32 %v672, 0.044715
      %v681 = vmul.f32 %v673, 0.044715
      %v682 = vmul.f32 %v674, 0.044715
      %v683 = vmul.f32 %v675, 0.044715
      %v684 = vmul.f32 %v676, 0.044715
      %v685 = vadd.f32 %v631, %v677
      %v686 = vadd.f32 %v634, %v678
      %v687 = vadd.f32 %v639, %v679
      %v688 = vadd.f32 %v642, %v680
      %v689 = vadd.f32 %v647, %v681
      %v690 = vadd.f32 %v650, %v682
      %v691 = vadd.f32 %v655, %v683
      %v692 = vadd.f32 %v658, %v684
      %v693 = vmul.f32 %v685, 0.7978846
      %v694 = vmul.f32 %v686, 0.7978846
      %v695 = vmul.f32 %v687, 0.7978846
      %v696 = vmul.f32 %v688, 0.7978846
      %v697 = vmul.f32 %v689, 0.7978846
      %v698 = vmul.f32 %v690, 0.7978846
      %v699 = vmul.f32 %v691, 0.7978846
      %v700 = vmul.f32 %v692, 0.7978846
      %v701 = vtanh.pop %v693
      %v702 = vtanh.pop %v694
      %v703 = vtanh.pop %v695
      %v704 = vtanh.pop %v696
      %v705 = vtanh.pop %v697
      %v706 = vtanh.pop %v698
      %v707 = vtanh.pop %v699
      %v708 = vtanh.pop %v700
      %v709 = vadd.f32 %v701, 1.0
      %v710 = vadd.f32 %v702, 1.0
      %v711 = vadd.f32 %v703, 1.0
      %v712 = vadd.f32 %v704, 1.0
      %v713 = vadd.f32 %v705, 1.0
      %v714 = vadd.f32 %v706, 1.0
      %v715 = vadd.f32 %v707, 1.0
      %v716 = vadd.f32 %v708, 1.0
      %v717 = vmul.f32 %v709, 0.5
      %v718 = vmul.f32 %v710, 0.5
      %v719 = vmul.f32 %v711, 0.5
      %v720 = vmul.f32 %v712, 0.5
      %v721 = vmul.f32 %v713, 0.5
      %v722 = vmul.f32 %v714, 0.5
      %v723 = vmul.f32 %v715, 0.5
      %v724 = vmul.f32 %v716, 0.5
      %v725 = vmul.f32 %v631, %v717
      %v726 = vmul.f32 %v634, %v718
      %v727 = vmul.f32 %v639, %v719
      %v728 = vmul.f32 %v642, %v720
      %v729 = vmul.f32 %v647, %v721
      %v730 = vmul.f32 %v650, %v722
      %v731 = vmul.f32 %v655, %v723
      %v732 = vmul.f32 %v658, %v724
      %v733 = vmul.f32 %v725, 1.7015043
      %v734 = vmul.f32 %v726, 1.7015043
      %v735 = vmul.f32 %v727, 1.7015043
      %v736 = vmul.f32 %v728, 1.7015043
      %v737 = vmul.f32 %v729, 1.7015043
      %v738 = vmul.f32 %v730, 1.7015043
      %v739 = vmul.f32 %v731, 1.7015043
      %v740 = vmul.f32 %v732, 1.7015043
      %v741 = vpack.c.bf16 %v734, %v733
      %v742 = vpack.c.bf16 %v736, %v735
      %v743 = vpack.c.bf16 %v738, %v737
      %v744 = vpack.c.bf16 %v740, %v739
      %v749 = vunpack.c.l.b16 %v741
      %v750 = vunpack.c.h.b16 %v741
      %v751 = vunpack.c.l.b16 %v742
      %v752 = vunpack.c.h.b16 %v742
      %v753 = vunpack.c.l.b16 %v743
      %v754 = vunpack.c.h.b16 %v743
      %v755 = vunpack.c.l.b16 %v744
      %v756 = vunpack.c.h.b16 %v744
      %v757 = vpack.c.b16 %v749, %v749
      %v758 = vpack.c.b16 %v750, %v750
      %v759 = vpack.c.b16 %v751, %v751
      %v760 = vpack.c.b16 %v752, %v752
      %v761 = vpack.c.b16 %v753, %v753
      %v762 = vpack.c.b16 %v754, %v754
      %v763 = vpack.c.b16 %v755, %v755
      %v764 = vpack.c.b16 %v756, %v756
      %773 = vst [vmem:[%s267] sm:$0xf] %v757
      %774 = vst [vmem:[%s267 + $0x4] sm:$0xf] %v758
      %775 = vst [vmem:[%s267 + $0x8] sm:$0xf] %v759
      %776 = vst [vmem:[%s267 + $0xc] sm:$0xf] %v760
      %777 = vst [vmem:[%s267 + $0x10] sm:$0xf] %v761
      %778 = vst [vmem:[%s267 + $0x14] sm:$0xf] %v762
      %779 = vst [vmem:[%s267 + $0x18] sm:$0xf] %v763
      %780 = vst [vmem:[%s267 + $0x1c] sm:$0xf] %v764
      %s781 = smul.u32 8, %s18
      %p782 = scmp.lt.s32.totalorder %s781, 15
      %s783 = scalar_select %p782, %s781, 15
      %s784 = smul.addr %s783, 4
      %s785 = scalar_lea.vmem %s5, %s784
      %s786 = smul.u32 8, %s18
      %p787 = scmp.lt.s32.totalorder %s786, 15
      %s788 = scalar_select %p787, %s786, 15
      %s789 = smul.addr %s788, 4
      %s790 = scalar_lea.vmem %s6, %s789
      // Predicated region
      $region41: #{nfnet_forward.4} parent=39 // pred_check
        %p791 = pneg %p146
      $region42: #{nfnet_forward.4} parent=39 // pred_check_branch
        %793 = sbr.rel (%p791) target = $region44
      $region43: #{nfnet_forward.4} parent=39 // pred_region
        %s794 = smul.u32 8, %s18
      $region44: #{nfnet_forward.4} parent=39 // pred_fallthru
        _
      // Predicated region
      $region45: #{nfnet_forward.4} parent=39 // pred_check
        %p795 = pneg %p172
      $region46: #{nfnet_forward.4} parent=39 // pred_check_branch
        %797 = sbr.rel (%p795) target = $region48
      $region47: #{nfnet_forward.4} parent=39 // pred_region
        %s798 = smul.u32 8, %s18
      $region48: #{nfnet_forward.4} parent=39 // pred_fallthru
        _
    $region40: #{nfnet_forward.4} parent=5 // pred_fallthru
      _
    %p799 = scmp.le.s32.totalorder 2, %s13
    // Predicated region
    $region49: #{nfnet_forward.4} parent=5 // pred_check
      %p800 = pneg %p799
    $region50: #{nfnet_forward.4} parent=5 // pred_check_branch
      %802 = sbr.rel (%p800) target = $region52
    $region51: #{nfnet_forward.4} parent=5 // pred_region
      %s803 = ssub.s32 %s13, 2
      // Predicated region
      $region53: #{nfnet_forward.4} parent=51 // pred_check
        %p804 = pneg %p152
      $region54: #{nfnet_forward.4} parent=51 // pred_check_branch
        %806 = sbr.rel (%p804) target = $region56
      $region55: #{nfnet_forward.4} parent=51 // pred_region
        %s807 = smul.u32 8, %s19
        %p808 = scmp.lt.s32.totalorder %s807, 15
        %s809 = scalar_select %p808, %s807, 15
        %s810 = smul.addr %s809, 4
        %s811 = scalar_lea.vmem %s5, %s810
      $region56: #{nfnet_forward.4} parent=51 // pred_fallthru
        _
      // Predicated region
      $region57: #{nfnet_forward.4} parent=51 // pred_check
        %p812 = pneg %p178
      $region58: #{nfnet_forward.4} parent=51 // pred_check_branch
        %814 = sbr.rel (%p812) target = $region60
      $region59: #{nfnet_forward.4} parent=51 // pred_region
        %s815 = smul.u32 8, %s19
        %p816 = scmp.lt.s32.totalorder %s815, 15
        %s817 = scalar_select %p816, %s815, 15
        %s818 = smul.addr %s817, 4
        %s819 = scalar_lea.vmem %s6, %s818
      $region60: #{nfnet_forward.4} parent=51 // pred_fallthru
        _
    $region52: #{nfnet_forward.4} parent=5 // pred_fallthru
      _
  $region6: #{nfnet_forward.4} parent=0 // loop_footer
    %s17 = sadd.s32 1, %s13
  $region7: #{nfnet_forward.4} parent=0 // loop_footer_branch
    %12 = sbr.rel target = $region3
  $region8: #{nfnet_forward.4} parent=0 // loop_exit
    _

// kernel: nfnet_forward.5
$region0: #{nfnet_forward.5}
  #allocation0 [shape = 'u32[]', space=smem, size = 0x4, offset = 0x4, fixed_abs, tag = 'smem constant byte address 0x4 - core index']
  #allocation1 [shape = 'u32[144,128]{1,0:T(1,128)}', space=vmem, size = 0x12000, scoped, tag = 'internal scratch']
  %s0 = inlined_call_operand.vmem [shape: bf16[32,144], index: 0, kind: input, shape index: {}]
  %s1 = inlined_call_operand.vmem [shape: bf16[144,128], index: 1, kind: input, shape index: {}]
  %s2 = inlined_call_operand.vmem [shape: f32[1,128], index: 2, kind: input, shape index: {}]
  %s3 = inlined_call_operand.vmem [shape: bf16[32,128], index: 3, kind: output, shape index: {}]
  %s4 = sld [smem:[#allocation0]]
  $region45: #{nfnet_forward.5} parent=0
    _
  %s6 = ssub.s32 1, %s4
  %s7 = scalar_select 0, %s6, %s4
  loop: start=0, step=1, limit=4
  $region2: #{nfnet_forward.5} parent=0 // loop_pre_header
    _
  $region3: #{nfnet_forward.5} parent=0 // loop_header
    %s9 = sphi 0, %s13
    %p10 = scmp.ge.s32.totalorder %s9, 4
    %s19 = sphi 0, %s21
    %s22 = sphi 0, %s19
    %s23 = sphi 0, %s22
    %s39 = sphi 0, %s23
    %s43 = sphi 0, %s43
    %s45 = sphi 0, %s43
    %s46 = sphi 0, %s45
    %s60 = sphi 0, %s46
    %s64 = sphi 0, %s64
    %s66 = sphi 0, %s64
    %s67 = sphi 0, %s66
    %s81 = sphi 0, %s67
    %s87 = sphi 0, %s89
    %s90 = sphi 0, %s87
    %s91 = sphi 0, %s90
    %s107 = sphi 0, %s91
  $region4: #{nfnet_forward.5} parent=0 // loop_header_branch
    %12 = sbr.rel (%p10) target = $region8
  $region5: #{nfnet_forward.5} parent=0 // loop_body
    %s14 = ssub.s32 %s9, 1
    %s15 = ssub.s32 %s9, 2
    %s16 = sadd.s32 %s9, 1
    %s17 = ssub.s32 %s9, %s16
    %p18 = scmp.eq.s32.totalorder %s17, 0
    %s20 = sadd.s32 %s19, 1
    %s21 = scalar_select %p18, %s19, %s20
    %p24 = pneg %p18
    %p25 = scmp.eq.s32.totalorder %s9, 1
    %p26 = por %p24, %p25
    %p27 = scmp.ne.s32.totalorder %s19, %s22
    %p28 = scmp.eq.s32.totalorder %s9, 0
    %p29 = por %p27, %p28
    %p30 = scmp.ne.s32.totalorder %s19, %s22
    %p31 = scmp.eq.s32.totalorder %s14, 1
    %p32 = por %p30, %p31
    %p33 = scmp.ne.s32.totalorder %s22, %s23
    %p34 = scmp.eq.s32.totalorder %s14, 0
    %p35 = por %p33, %p34
    %p36 = scmp.ne.s32.totalorder %s22, %s23
    %p37 = scmp.eq.s32.totalorder %s15, 1
    %p38 = por %p36, %p37
    %p40 = scmp.ne.s32.totalorder %s23, %s39
    %p41 = scmp.eq.s32.totalorder %s15, 0
    %p42 = por %p40, %p41
    %s44 = sadd.s32 %s43, 1
    %p47 = scmp.eq.s32.totalorder %s9, 1
    %p48 = scmp.ne.s32.totalorder %s43, %s45
    %p49 = scmp.eq.s32.totalorder %s9, 0
    %p50 = por %p48, %p49
    %p51 = scmp.ne.s32.totalorder %s43, %s45
    %p52 = scmp.eq.s32.totalorder %s14, 1
    %p53 = por %p51, %p52
    %p54 = scmp.ne.s32.totalorder %s45, %s46
    %p55 = scmp.eq.s32.totalorder %s14, 0
    %p56 = por %p54, %p55
    %p57 = scmp.ne.s32.totalorder %s45, %s46
    %p58 = scmp.eq.s32.totalorder %s15, 1
    %p59 = por %p57, %p58
    %p61 = scmp.ne.s32.totalorder %s46, %s60
    %p62 = scmp.eq.s32.totalorder %s15, 0
    %p63 = por %p61, %p62
    %s65 = sadd.s32 %s64, 1
    %p68 = scmp.eq.s32.totalorder %s9, 1
    %p69 = scmp.ne.s32.totalorder %s64, %s66
    %p70 = scmp.eq.s32.totalorder %s9, 0
    %p71 = por %p69, %p70
    %p72 = scmp.ne.s32.totalorder %s64, %s66
    %p73 = scmp.eq.s32.totalorder %s14, 1
    %p74 = por %p72, %p73
    %p75 = scmp.ne.s32.totalorder %s66, %s67
    %p76 = scmp.eq.s32.totalorder %s14, 0
    %p77 = por %p75, %p76
    %p78 = scmp.ne.s32.totalorder %s66, %s67
    %p79 = scmp.eq.s32.totalorder %s15, 1
    %p80 = por %p78, %p79
    %p82 = scmp.ne.s32.totalorder %s67, %s81
    %p83 = scmp.eq.s32.totalorder %s15, 0
    %p84 = por %p82, %p83
    %s85 = ssub.s32 %s9, %s16
    %p86 = scmp.eq.s32.totalorder %s85, 0
    %s88 = sadd.s32 %s87, 1
    %s89 = scalar_select %p86, %s87, %s88
    %p92 = pneg %p86
    %p93 = scmp.eq.s32.totalorder %s9, 1
    %p94 = por %p92, %p93
    %p95 = scmp.ne.s32.totalorder %s87, %s90
    %p96 = scmp.eq.s32.totalorder %s9, 0
    %p97 = por %p95, %p96
    %p98 = scmp.ne.s32.totalorder %s87, %s90
    %p99 = scmp.eq.s32.totalorder %s14, 1
    %p100 = por %p98, %p99
    %p101 = scmp.ne.s32.totalorder %s90, %s91
    %p102 = scmp.eq.s32.totalorder %s14, 0
    %p103 = por %p101, %p102
    %p104 = scmp.ne.s32.totalorder %s90, %s91
    %p105 = scmp.eq.s32.totalorder %s15, 1
    %p106 = por %p104, %p105
    %p108 = scmp.ne.s32.totalorder %s91, %s107
    %p109 = scmp.eq.s32.totalorder %s15, 0
    %p110 = por %p108, %p109
    %p111 = scmp.le.s32.totalorder 1, %s9
    %p112 = scmp.lt.s32.totalorder %s9, 3
    %p113 = pnand %p111, %p112
    %p114 = pneg %p113
    // Predicated region
    $region9: #{nfnet_forward.5} parent=5 // pred_check
      _
    $region10: #{nfnet_forward.5} parent=5 // pred_check_branch
      %116 = sbr.rel (%p113) target = $region12
    $region11: #{nfnet_forward.5} parent=5 // pred_region
      %s117 = ssub.s32 %s9, 1
      // Predicated region
      $region13: #{nfnet_forward.5} parent=11 // pred_check
        %p118 = pneg %p56
      $region14: #{nfnet_forward.5} parent=11 // pred_check_branch
        %120 = sbr.rel (%p118) target = $region16
      $region15: #{nfnet_forward.5} parent=11 // pred_region
        _
      $region16: #{nfnet_forward.5} parent=11 // pred_fallthru
        _
      // Predicated region
      $region17: #{nfnet_forward.5} parent=11 // pred_check
        %p121 = pneg %p77
      $region18: #{nfnet_forward.5} parent=11 // pred_check_branch
        %123 = sbr.rel (%p121) target = $region20
      $region19: #{nfnet_forward.5} parent=11 // pred_region
        _
      $region20: #{nfnet_forward.5} parent=11 // pred_fallthru
        _
    $region12: #{nfnet_forward.5} parent=5 // pred_fallthru
      _
    %p124 = scmp.lt.s32.totalorder %s9, 2
    // Predicated region
    $region21: #{nfnet_forward.5} parent=5 // pred_check
      %p125 = pneg %p124
    $region22: #{nfnet_forward.5} parent=5 // pred_check_branch
      %127 = sbr.rel (%p125) target = $region24
    $region23: #{nfnet_forward.5} parent=5 // pred_region
      // Predicated region
      $region25: #{nfnet_forward.5} parent=23 // pred_check
        %p128 = pneg %p29
      $region26: #{nfnet_forward.5} parent=23 // pred_check_branch
        %130 = sbr.rel (%p128) target = $region28
      $region27: #{nfnet_forward.5} parent=23 // pred_region
        %s131 = smul.u32 2, %s9
        %p132 = scmp.lt.s32.totalorder %s131, 3
        %s133 = scalar_select %p132, %s131, 3
        %s134 = smul.addr %s133, 2
        %s135 = smul.addr %s134, 4
        %s136 = scalar_lea.vmem %s0, %s135
        %s137 = smul.u32 2, %s9
      $region28: #{nfnet_forward.5} parent=23 // pred_fallthru
        _
    $region24: #{nfnet_forward.5} parent=5 // pred_fallthru
      _
    %p138 = scmp.le.s32.totalorder 1, %s9
    %p139 = scmp.lt.s32.totalorder %s9, 3
    %p140 = pnand %p138, %p139
    %p141 = pneg %p140
    // Predicated region
    $region29: #{nfnet_forward.5} parent=5 // pred_check
      _
    $region30: #{nfnet_forward.5} parent=5 // pred_check_branch
      %143 = sbr.rel (%p140) target = $region32
    $region31: #{nfnet_forward.5} parent=5 // pred_region
      %s144 = ssub.s32 %s9, 1
      %s145 = smul.u32 2, %s14
      %p146 = scmp.lt.s32.totalorder %s145, 3
      %s147 = scalar_select %p146, %s145, 3
      %s148 = smul.addr %s147, 2
      %s149 = smul.addr %s148, 4
      %s150 = scalar_lea.vmem %s0, %s149
      %p151 = pneg %p35
      %p152 = pneg %p32
      %p153 = pneg %p56
      %p154 = pneg %p53
      %p155 = pneg %p77
      %p156 = pneg %p74
      %p157 = pneg %p103
      %p158 = pneg %p100
      %s159 = smul.u32 2, %s14
      %p160 = scmp.lt.s32.totalorder %s159, 3
      %s161 = scalar_select %p160, %s159, 3
      %s162 = smul.addr %s161, 4
      %s163 = scalar_lea.vmem %s3, %s162
      %s164 = smul.u32 2, %s14
      %p165 = scmp.lt.s32.totalorder %s164, 3
      %s166 = scalar_select %p165, %s164, 3
      %s167 = smul.addr %s166, 2
      %s168 = smul.addr %s167, 4
      %s169 = scalar_lea.vmem %s0, %s168
      %s170 = smul.u32 2, %s14
      %s171 = smul.u32 2, %s14
      %p172 = scmp.lt.s32.totalorder %s171, 3
      %s173 = scalar_select %p172, %s171, 3
      %s174 = smul.addr %s173, 4
      %s175 = scalar_lea.vmem %s3, %s174
      %s176 = smul.u32 2, %s14
      %v178 = vld [vmem:[%s169] sm:$0xff]
      %v179 = vld [vmem:[%s169 + $0x8] sm:$0xff]
      %v180 = vld [vmem:[%s1] sm:$0xf]
      %v181 = vld [vmem:[%s1 + $0x4] sm:$0xf]
      %v182 = vld [vmem:[%s1 + $0x8] sm:$0xf]
      %v183 = vld [vmem:[%s1 + $0xc] sm:$0xf]
      %v184 = vld [vmem:[%s1 + $0x10] sm:$0xf]
      %v185 = vld [vmem:[%s1 + $0x14] sm:$0xf]
      %v186 = vld [vmem:[%s1 + $0x18] sm:$0xf]
      %v187 = vld [vmem:[%s1 + $0x1c] sm:$0xf]
      %v188 = vld [vmem:[%s1 + $0x20] sm:$0xf]
      %v189 = vld [vmem:[%s1 + $0x24] sm:$0xf]
      %v190 = vld [vmem:[%s1 + $0x28] sm:$0xf]
      %v191 = vld [vmem:[%s1 + $0x2c] sm:$0xf]
      %v192 = vld [vmem:[%s1 + $0x30] sm:$0xf]
      %v193 = vld [vmem:[%s1 + $0x34] sm:$0xf]
      %v194 = vld [vmem:[%s1 + $0x38] sm:$0xf]
      %v195 = vld [vmem:[%s1 + $0x3c] sm:$0xf]
      %v196 = vld [vmem:[%s1 + $0x40] sm:$0xf]
      %v197 = vld [vmem:[%s1 + $0x44] sm:$0xf]
      %v198 = vld [vmem:[%s2] sm:$0x1]
      %v200 = vlaneseq
      %v201 = vshrl.u32 %v200, 7
      %v202 = vsub.s32 0, %v201
      %v203 = vrot.slane %v198, %v202
      %v207 = vunpack.c.l.b16 %v178
      %v208 = vunpack.c.h.b16 %v178
      %v209 = vunpack.c.l.b16 %v179
      %v210 = vunpack.c.h.b16 %v179
      %v211 = vpack.c.b16 %v209, %v207
      %v212 = vpack.c.b16 %v210, %v208
      %v232 = vunpack.c.l.b16 %v180
      %v233 = vunpack.c.l.b16 %v181
      %v234 = vunpack.c.l.b16 %v182
      %v235 = vunpack.c.l.b16 %v183
      %v236 = vunpack.c.l.b16 %v184
      %v237 = vunpack.c.l.b16 %v185
      %v238 = vunpack.c.l.b16 %v186
      %v239 = vunpack.c.l.b16 %v187
      %v240 = vunpack.c.l.b16 %v188
      %v241 = vunpack.c.l.b16 %v189
      %v242 = vunpack.c.l.b16 %v190
      %v243 = vunpack.c.l.b16 %v191
      %v244 = vunpack.c.l.b16 %v192
      %v245 = vunpack.c.l.b16 %v193
      %v246 = vunpack.c.l.b16 %v194
      %v247 = vunpack.c.l.b16 %v195
      %v248 = vunpack.c.l.b16 %v196
      %v249 = vunpack.c.l.b16 %v197
      %v250 = vpack.c.b16 %v233, %v232
      %v251 = vpack.c.b16 %v235, %v234
      %v252 = vpack.c.b16 %v237, %v236
      %v253 = vpack.c.b16 %v239, %v238
      %v254 = vpack.c.b16 %v241, %v240
      %v255 = vpack.c.b16 %v243, %v242
      %v256 = vpack.c.b16 %v245, %v244
      %v257 = vpack.c.b16 %v247, %v246
      %v258 = vpack.c.b16 %v249, %v248
      %vm268 = vcmask 130048
      %v270 = vsel %vm268, %v212, 0
      %272 = vmatprep.subr.bf16.mxu0 0
      %273 = vmatpush1.bf16.msra.mxu0 %v250
      %274 = vmatprep.subr.bf16.mxu0 0
      %275 = vmatpush1.bf16.msra.mxu0 %v251
      %276 = vmatprep.subr.bf16.mxu0 0
      %277 = vmatpush1.bf16.msra.mxu0 %v252
      %278 = vmatprep.subr.bf16.mxu0 0
      %279 = vmatpush1.bf16.msra.mxu0 %v253
      %280 = vmatprep.subr.bf16.mxu0 0
      %281 = vmatpush1.bf16.msra.mxu0 %v254
      %282 = vmatprep.subr.bf16.mxu0 0
      %283 = vmatpush1.bf16.msra.mxu0 %v255
      %284 = vmatprep.subr.bf16.mxu0 0
      %285 = vmatpush1.bf16.msra.mxu0 %v256
      %286 = vmatprep.subr.bf16.mxu0 0
      %287 = vmatpush1.bf16.msra.mxu0 %v257
      %288 = vmatprep.subr.bf16.mxu0 0
      %289 = vmatpush1.bf16.msra.mxu0 %v258
      %290 = vmatprep.subr.bf16.mxu0 0
      %291 = vmatpush1.bf16.msra.mxu0 0
      %292 = vmatprep.subr.bf16.mxu0 0
      %293 = vmatpush1.bf16.msra.mxu0 0
      %294 = vmatprep.subr.bf16.mxu0 0
      %295 = vmatpush1.bf16.msra.mxu0 0
      %296 = vmatprep.subr.bf16.mxu0 0
      %297 = vmatpush1.bf16.msra.mxu0 0
      %298 = vmatprep.subr.bf16.mxu0 0
      %299 = vmatpush1.bf16.msra.mxu0 0
      %300 = vmatprep.subr.bf16.mxu0 0
      %301 = vmatpush1.bf16.msra.mxu0 0
      %302 = vmatprep.subr.bf16.mxu0 0
      %303 = vmatpush1.bf16.msra.mxu0 0
      %304 = vmatprep.mubr.bf16.mxu0 %v270
      %305 = vmatmul.mubr.bf16.gmra.mrb[0].mxu0 %v211
      %v306 = vpop.f32.mrb[0].mxu0
      %v307 = vadd.f32 %v203, %v306
      %v308 = vpop.f32.mrb[0].mxu0
      %v309 = vpop.f32.mrb[0].mxu0
      %v310 = vadd.f32 %v203, %v309
      %v311 = vpop.f32.mrb[0].mxu0
      %312 = vdwg.mxu0
      %v313 = vmul.f32 %v307, %v307
      %v314 = vmul.f32 %v310, %v310
      %v315 = vmul.f32 %v307, %v313
      %v316 = vmul.f32 %v310, %v314
      %v317 = vmul.f32 %v315, 0.044715
      %v318 = vmul.f32 %v316, 0.044715
      %v319 = vadd.f32 %v307, %v317
      %v320 = vadd.f32 %v310, %v318
      %v321 = vmul.f32 %v319, 0.7978846
      %v322 = vmul.f32 %v320, 0.7978846
      %v323 = vtanh.pop %v321
      %v324 = vtanh.pop %v322
      %v325 = vadd.f32 %v323, 1.0
      %v326 = vadd.f32 %v324, 1.0
      %v327 = vmul.f32 %v325, 0.5
      %v328 = vmul.f32 %v326, 0.5
      %v329 = vmul.f32 %v307, %v327
      %v330 = vmul.f32 %v310, %v328
      %v331 = vmul.f32 %v329, 1.7015043
      %v332 = vmul.f32 %v330, 1.7015043
      %v333 = vpack.c.bf16 %v332, %v331
      %v335 = vunpack.c.l.b16 %v333
      %v336 = vunpack.c.h.b16 %v333
      %v337 = vpack.c.b16 %v335, %v335
      %v338 = vpack.c.b16 %v336, %v336
      %341 = vst [vmem:[%s175] sm:$0xf] %v337
      %342 = vst [vmem:[%s175 + $0x4] sm:$0xf] %v338
      %s343 = smul.u32 2, %s14
      %p344 = scmp.lt.s32.totalorder %s343, 3
      %s345 = scalar_select %p344, %s343, 3
      %s346 = smul.addr %s345, 4
      %s347 = scalar_lea.vmem %s3, %s346
      // Predicated region
      $region33: #{nfnet_forward.5} parent=31 // pred_check
        %p348 = pneg %p100
      $region34: #{nfnet_forward.5} parent=31 // pred_check_branch
        %350 = sbr.rel (%p348) target = $region36
      $region35: #{nfnet_forward.5} parent=31 // pred_region
        %s351 = smul.u32 2, %s14
      $region36: #{nfnet_forward.5} parent=31 // pred_fallthru
        _
    $region32: #{nfnet_forward.5} parent=5 // pred_fallthru
      _
    %p352 = scmp.le.s32.totalorder 2, %s9
    // Predicated region
    $region37: #{nfnet_forward.5} parent=5 // pred_check
      %p353 = pneg %p352
    $region38: #{nfnet_forward.5} parent=5 // pred_check_branch
      %355 = sbr.rel (%p353) target = $region40
    $region39: #{nfnet_forward.5} parent=5 // pred_region
      %s356 = ssub.s32 %s9, 2
      // Predicated region
      $region41: #{nfnet_forward.5} parent=39 // pred_check
        %p357 = pneg %p106
      $region42: #{nfnet_forward.5} parent=39 // pred_check_branch
        %359 = sbr.rel (%p357) target = $region44
      $region43: #{nfnet_forward.5} parent=39 // pred_region
        %s360 = smul.u32 2, %s15
        %p361 = scmp.lt.s32.totalorder %s360, 3
        %s362 = scalar_select %p361, %s360, 3
        %s363 = smul.addr %s362, 4
        %s364 = scalar_lea.vmem %s3, %s363
      $region44: #{nfnet_forward.5} parent=39 // pred_fallthru
        _
    $region40: #{nfnet_forward.5} parent=5 // pred_fallthru
      _
  $region6: #{nfnet_forward.5} parent=0 // loop_footer
    %s13 = sadd.s32 1, %s9
  $region7: #{nfnet_forward.5} parent=0 // loop_footer_branch
    %8 = sbr.rel target = $region3
  $region8: #{nfnet_forward.5} parent=0 // loop_exit
    _

// kernel: nfnet_forward.7
$region0: #{nfnet_forward.7}
  #allocation0 [shape = 'u32[]', space=smem, size = 0x4, offset = 0x4, fixed_abs, tag = 'smem constant byte address 0x4 - core index']
  #allocation1 [shape = 'u32[144,128]{1,0:T(1,128)}', space=vmem, size = 0x12000, scoped, tag = 'internal scratch']
  %s0 = inlined_call_operand.vmem [shape: bf16[2,16,128], index: 0, kind: input, shape index: {}]
  %s1 = inlined_call_operand.vmem [shape: bf16[128,128], index: 1, kind: input, shape index: {}]
  %s2 = inlined_call_operand.vmem [shape: f32[1,128], index: 2, kind: input, shape index: {}]
  %s3 = inlined_call_operand.vmem [shape: bf16[128,128], index: 3, kind: input, shape index: {}]
  %s4 = inlined_call_operand.vmem [shape: f32[1,128], index: 4, kind: input, shape index: {}]
  %s5 = inlined_call_operand.hbm [shape: f32[2,1,128], index: 5, kind: output, shape index: {}]
  %s6 = sld [smem:[#allocation0]]
  $region53: #{nfnet_forward.7} parent=0
    _
  %s8 = ssub.s32 1, %s6
  %s9 = scalar_select 0, %s8, %s6
  $region1: #{nfnet_forward.7} parent=0
    #allocation2 [shape = 'u8[1024]{0}', space=vmem, size = 0x400, scoped, tag = 'output window, operand 0']
    #allocation3 [shape = 's32[2]{0}', space=sflag, size = 0x8, scoped, tag = 'scoped memory for nfnet_forward.7']
    %10 = vsyncpa [#allocation3], 0
    %s11 = scalar_lea.sflag [#allocation3], 1
    %12 = vsyncpa %s11, 0
    loop: start=0, step=1, limit=4
    $region2: #{nfnet_forward.7} parent=1 // loop_pre_header
      _
    $region3: #{nfnet_forward.7} parent=1 // loop_header
      %s14 = sphi 0, %s18
      %p15 = scmp.ge.s32.totalorder %s14, 4
      %s24 = sphi 0, %s26
      %s27 = sphi 0, %s24
      %s28 = sphi 0, %s27
      %s44 = sphi 0, %s28
      %s48 = sphi 0, %s48
      %s50 = sphi 0, %s48
      %s51 = sphi 0, %s50
      %s65 = sphi 0, %s51
      %s69 = sphi 0, %s69
      %s71 = sphi 0, %s69
      %s72 = sphi 0, %s71
      %s86 = sphi 0, %s72
      %s90 = sphi 0, %s90
      %s92 = sphi 0, %s90
      %s93 = sphi 0, %s92
      %s107 = sphi 0, %s93
      %s111 = sphi 0, %s111
      %s113 = sphi 0, %s111
      %s114 = sphi 0, %s113
      %s128 = sphi 0, %s114
      %s134 = sphi 0, %s136
      %s137 = sphi 0, %s134
      %s138 = sphi 0, %s137
      %s154 = sphi 0, %s138
    $region4: #{nfnet_forward.7} parent=1 // loop_header_branch
      %17 = sbr.rel (%p15) target = $region8
    $region5: #{nfnet_forward.7} parent=1 // loop_body
      %s19 = ssub.s32 %s14, 1
      %s20 = ssub.s32 %s14, 2
      %s21 = sadd.s32 %s14, 1
      %s22 = ssub.s32 %s14, %s21
      %p23 = scmp.eq.s32.totalorder %s22, 0
      %s25 = sadd.s32 %s24, 1
      %s26 = scalar_select %p23, %s24, %s25
      %p29 = pneg %p23
      %p30 = scmp.eq.s32.totalorder %s14, 1
      %p31 = por %p29, %p30
      %p32 = scmp.ne.s32.totalorder %s24, %s27
      %p33 = scmp.eq.s32.totalorder %s14, 0
      %p34 = por %p32, %p33
      %p35 = scmp.ne.s32.totalorder %s24, %s27
      %p36 = scmp.eq.s32.totalorder %s19, 1
      %p37 = por %p35, %p36
      %p38 = scmp.ne.s32.totalorder %s27, %s28
      %p39 = scmp.eq.s32.totalorder %s19, 0
      %p40 = por %p38, %p39
      %p41 = scmp.ne.s32.totalorder %s27, %s28
      %p42 = scmp.eq.s32.totalorder %s20, 1
      %p43 = por %p41, %p42
      %p45 = scmp.ne.s32.totalorder %s28, %s44
      %p46 = scmp.eq.s32.totalorder %s20, 0
      %p47 = por %p45, %p46
      %s49 = sadd.s32 %s48, 1
      %p52 = scmp.eq.s32.totalorder %s14, 1
      %p53 = scmp.ne.s32.totalorder %s48, %s50
      %p54 = scmp.eq.s32.totalorder %s14, 0
      %p55 = por %p53, %p54
      %p56 = scmp.ne.s32.totalorder %s48, %s50
      %p57 = scmp.eq.s32.totalorder %s19, 1
      %p58 = por %p56, %p57
      %p59 = scmp.ne.s32.totalorder %s50, %s51
      %p60 = scmp.eq.s32.totalorder %s19, 0
      %p61 = por %p59, %p60
      %p62 = scmp.ne.s32.totalorder %s50, %s51
      %p63 = scmp.eq.s32.totalorder %s20, 1
      %p64 = por %p62, %p63
      %p66 = scmp.ne.s32.totalorder %s51, %s65
      %p67 = scmp.eq.s32.totalorder %s20, 0
      %p68 = por %p66, %p67
      %s70 = sadd.s32 %s69, 1
      %p73 = scmp.eq.s32.totalorder %s14, 1
      %p74 = scmp.ne.s32.totalorder %s69, %s71
      %p75 = scmp.eq.s32.totalorder %s14, 0
      %p76 = por %p74, %p75
      %p77 = scmp.ne.s32.totalorder %s69, %s71
      %p78 = scmp.eq.s32.totalorder %s19, 1
      %p79 = por %p77, %p78
      %p80 = scmp.ne.s32.totalorder %s71, %s72
      %p81 = scmp.eq.s32.totalorder %s19, 0
      %p82 = por %p80, %p81
      %p83 = scmp.ne.s32.totalorder %s71, %s72
      %p84 = scmp.eq.s32.totalorder %s20, 1
      %p85 = por %p83, %p84
      %p87 = scmp.ne.s32.totalorder %s72, %s86
      %p88 = scmp.eq.s32.totalorder %s20, 0
      %p89 = por %p87, %p88
      %s91 = sadd.s32 %s90, 1
      %p94 = scmp.eq.s32.totalorder %s14, 1
      %p95 = scmp.ne.s32.totalorder %s90, %s92
      %p96 = scmp.eq.s32.totalorder %s14, 0
      %p97 = por %p95, %p96
      %p98 = scmp.ne.s32.totalorder %s90, %s92
      %p99 = scmp.eq.s32.totalorder %s19, 1
      %p100 = por %p98, %p99
      %p101 = scmp.ne.s32.totalorder %s92, %s93
      %p102 = scmp.eq.s32.totalorder %s19, 0
      %p103 = por %p101, %p102
      %p104 = scmp.ne.s32.totalorder %s92, %s93
      %p105 = scmp.eq.s32.totalorder %s20, 1
      %p106 = por %p104, %p105
      %p108 = scmp.ne.s32.totalorder %s93, %s107
      %p109 = scmp.eq.s32.totalorder %s20, 0
      %p110 = por %p108, %p109
      %s112 = sadd.s32 %s111, 1
      %p115 = scmp.eq.s32.totalorder %s14, 1
      %p116 = scmp.ne.s32.totalorder %s111, %s113
      %p117 = scmp.eq.s32.totalorder %s14, 0
      %p118 = por %p116, %p117
      %p119 = scmp.ne.s32.totalorder %s111, %s113
      %p120 = scmp.eq.s32.totalorder %s19, 1
      %p121 = por %p119, %p120
      %p122 = scmp.ne.s32.totalorder %s113, %s114
      %p123 = scmp.eq.s32.totalorder %s19, 0
      %p124 = por %p122, %p123
      %p125 = scmp.ne.s32.totalorder %s113, %s114
      %p126 = scmp.eq.s32.totalorder %s20, 1
      %p127 = por %p125, %p126
      %p129 = scmp.ne.s32.totalorder %s114, %s128
      %p130 = scmp.eq.s32.totalorder %s20, 0
      %p131 = por %p129, %p130
      %s132 = ssub.s32 %s14, %s21
      %p133 = scmp.eq.s32.totalorder %s132, 0
      %s135 = sadd.s32 %s134, 1
      %s136 = scalar_select %p133, %s134, %s135
      %p139 = pneg %p133
      %p140 = scmp.eq.s32.totalorder %s14, 1
      %p141 = por %p139, %p140
      %p142 = scmp.ne.s32.totalorder %s134, %s137
      %p143 = scmp.eq.s32.totalorder %s14, 0
      %p144 = por %p142, %p143
      %p145 = scmp.ne.s32.totalorder %s134, %s137
      %p146 = scmp.eq.s32.totalorder %s19, 1
      %p147 = por %p145, %p146
      %p148 = scmp.ne.s32.totalorder %s137, %s138
      %p149 = scmp.eq.s32.totalorder %s19, 0
      %p150 = por %p148, %p149
      %p151 = scmp.ne.s32.totalorder %s137, %s138
      %p152 = scmp.eq.s32.totalorder %s20, 1
      %p153 = por %p151, %p152
      %p155 = scmp.ne.s32.totalorder %s138, %s154
      %p156 = scmp.eq.s32.totalorder %s20, 0
      %p157 = por %p155, %p156
      %p158 = scmp.le.s32.totalorder 1, %s14
      %p159 = scmp.lt.s32.totalorder %s14, 3
      %p160 = pnand %p158, %p159
      %p161 = pneg %p160
      // Predicated region
      $region9: #{nfnet_forward.7} parent=5 // pred_check
        _
      $region10: #{nfnet_forward.7} parent=5 // pred_check_branch
        %163 = sbr.rel (%p160) target = $region12
      $region11: #{nfnet_forward.7} parent=5 // pred_region
        %s164 = ssub.s32 %s14, 1
        // Predicated region
        $region13: #{nfnet_forward.7} parent=11 // pred_check
          %p165 = pneg %p61
        $region14: #{nfnet_forward.7} parent=11 // pred_check_branch
          %167 = sbr.rel (%p165) target = $region16
        $region15: #{nfnet_forward.7} parent=11 // pred_region
          _
        $region16: #{nfnet_forward.7} parent=11 // pred_fallthru
          _
        // Predicated region
        $region17: #{nfnet_forward.7} parent=11 // pred_check
          %p168 = pneg %p82
        $region18: #{nfnet_forward.7} parent=11 // pred_check_branch
          %170 = sbr.rel (%p168) target = $region20
        $region19: #{nfnet_forward.7} parent=11 // pred_region
          _
        $region20: #{nfnet_forward.7} parent=11 // pred_fallthru
          _
        // Predicated region
        $region21: #{nfnet_forward.7} parent=11 // pred_check
          %p171 = pneg %p103
        $region22: #{nfnet_forward.7} parent=11 // pred_check_branch
          %173 = sbr.rel (%p171) target = $region24
        $region23: #{nfnet_forward.7} parent=11 // pred_region
          _
        $region24: #{nfnet_forward.7} parent=11 // pred_fallthru
          _
        // Predicated region
        $region25: #{nfnet_forward.7} parent=11 // pred_check
          %p174 = pneg %p124
        $region26: #{nfnet_forward.7} parent=11 // pred_check_branch
          %176 = sbr.rel (%p174) target = $region28
        $region27: #{nfnet_forward.7} parent=11 // pred_region
          _
        $region28: #{nfnet_forward.7} parent=11 // pred_fallthru
          _
      $region12: #{nfnet_forward.7} parent=5 // pred_fallthru
        _
      %p177 = scmp.lt.s32.totalorder %s14, 2
      // Predicated region
      $region29: #{nfnet_forward.7} parent=5 // pred_check
        %p178 = pneg %p177
      $region30: #{nfnet_forward.7} parent=5 // pred_check_branch
        %180 = sbr.rel (%p178) target = $region32
      $region31: #{nfnet_forward.7} parent=5 // pred_region
        // Predicated region
        $region33: #{nfnet_forward.7} parent=31 // pred_check
          %p181 = pneg %p34
        $region34: #{nfnet_forward.7} parent=31 // pred_check_branch
          %183 = sbr.rel (%p181) target = $region36
        $region35: #{nfnet_forward.7} parent=31 // pred_region
          %p184 = scmp.lt.s32.totalorder %s14, 1
          %s185 = scalar_select %p184, %s14, 1
          %s186 = smul.addr %s185, 2
          %s187 = smul.addr %s186, 4
          %s188 = scalar_lea.vmem %s0, %s187
        $region36: #{nfnet_forward.7} parent=31 // pred_fallthru
          _
      $region32: #{nfnet_forward.7} parent=5 // pred_fallthru
        _
      %p189 = scmp.le.s32.totalorder 1, %s14
      %p190 = scmp.lt.s32.totalorder %s14, 3
      %p191 = pnand %p189, %p190
      %p192 = pneg %p191
      // Predicated region
      $region37: #{nfnet_forward.7} parent=5 // pred_check
        _
      $region38: #{nfnet_forward.7} parent=5 // pred_check_branch
        %194 = sbr.rel (%p191) target = $region40
      $region39: #{nfnet_forward.7} parent=5 // pred_region
        %s195 = ssub.s32 %s14, 1
        %p196 = scmp.lt.s32.totalorder %s19, 1
        %s197 = scalar_select %p196, %s19, 1
        %s198 = smul.addr %s197, 2
        %s199 = smul.addr %s198, 4
        %s200 = scalar_lea.vmem %s0, %s199
        %p201 = pneg %p40
        %p202 = pneg %p37
        %p203 = pneg %p61
        %p204 = pneg %p58
        %p205 = pneg %p82
        %p206 = pneg %p79
        %p207 = pneg %p103
        %p208 = pneg %p100
        %p209 = pneg %p124
        %p210 = pneg %p121
        %p211 = pneg %p150
        %p212 = pneg %p147
        %s213 = sand.u32 %s137, 1
        %s214 = scalar_lea.sflag [#allocation3], %s213
        %s215 = sand.u32 %s137, 1
        %s216 = scalar_lea.vmem [#allocation2], %s215
        %p217 = scmp.lt.s32.totalorder %s19, 1
        %s218 = scalar_select %p217, %s19, 1
        %s219 = smul.addr %s218, 2
        %s220 = smul.addr %s219, 4
        %s221 = scalar_lea.vmem %s0, %s220
        %v223 = vld [vmem:[%s221] sm:$0xf]
        %v224 = vld [vmem:[%s221 + $0x4] sm:$0xf]
        %v225 = vld [vmem:[%s1] sm:$0xf]
        %v226 = vld [vmem:[%s1 + $0x4] sm:$0xf]
        %v227 = vld [vmem:[%s1 + $0x8] sm:$0xf]
        %v228 = vld [vmem:[%s1 + $0xc] sm:$0xf]
        %v229 = vld [vmem:[%s1 + $0x10] sm:$0xf]
        %v230 = vld [vmem:[%s1 + $0x14] sm:$0xf]
        %v231 = vld [vmem:[%s1 + $0x18] sm:$0xf]
        %v232 = vld [vmem:[%s1 + $0x1c] sm:$0xf]
        %v233 = vld [vmem:[%s1 + $0x20] sm:$0xf]
        %v234 = vld [vmem:[%s1 + $0x24] sm:$0xf]
        %v235 = vld [vmem:[%s1 + $0x28] sm:$0xf]
        %v236 = vld [vmem:[%s1 + $0x2c] sm:$0xf]
        %v237 = vld [vmem:[%s1 + $0x30] sm:$0xf]
        %v238 = vld [vmem:[%s1 + $0x34] sm:$0xf]
        %v239 = vld [vmem:[%s1 + $0x38] sm:$0xf]
        %v240 = vld [vmem:[%s1 + $0x3c] sm:$0xf]
        %v241 = vld [vmem:[%s2] sm:$0x1]
        %v243 = vlaneseq
        %v244 = vshrl.u32 %v243, 7
        %v245 = vsub.s32 0, %v244
        %v246 = vrot.slane %v241, %v245
        %v250 = vunpack.c.l.b16 %v223
        %v251 = vunpack.c.l.b16 %v224
        %v252 = vpack.c.b16 %v251, %v250
        %v270 = vunpack.c.l.b16 %v225
        %v271 = vunpack.c.l.b16 %v226
        %v272 = vunpack.c.l.b16 %v227
        %v273 = vunpack.c.l.b16 %v228
        %v274 = vunpack.c.l.b16 %v229
        %v275 = vunpack.c.l.b16 %v230
        %v276 = vunpack.c.l.b16 %v231
        %v277 = vunpack.c.l.b16 %v232
        %v278 = vunpack.c.l.b16 %v233
        %v279 = vunpack.c.l.b16 %v234
        %v280 = vunpack.c.l.b16 %v235
        %v281 = vunpack.c.l.b16 %v236
        %v282 = vunpack.c.l.b16 %v237
        %v283 = vunpack.c.l.b16 %v238
        %v284 = vunpack.c.l.b16 %v239
        %v285 = vunpack.c.l.b16 %v240
        %v286 = vpack.c.b16 %v271, %v270
        %v287 = vpack.c.b16 %v273, %v272
        %v288 = vpack.c.b16 %v275, %v274
        %v289 = vpack.c.b16 %v277, %v276
        %v290 = vpack.c.b16 %v279, %v278
        %v291 = vpack.c.b16 %v281, %v280
        %v292 = vpack.c.b16 %v283, %v282
        %v293 = vpack.c.b16 %v285, %v284
        %302 = vmatprep.subr.bf16.mxu0 0
        %303 = vmatpush1.bf16.msra.mxu0 %v286
        %304 = vmatprep.subr.bf16.mxu0 0
        %305 = vmatpush1.bf16.msra.mxu0 %v287
        %306 = vmatprep.subr.bf16.mxu0 0
        %307 = vmatpush1.bf16.msra.mxu0 %v288
        %308 = vmatprep.subr.bf16.mxu0 0
        %309 = vmatpush1.bf16.msra.mxu0 %v289
        %310 = vmatprep.subr.bf16.mxu0 0
        %311 = vmatpush1.bf16.msra.mxu0 %v290
        %312 = vmatprep.subr.bf16.mxu0 0
        %313 = vmatpush1.bf16.msra.mxu0 %v291
        %314 = vmatprep.subr.bf16.mxu0 0
        %315 = vmatpush1.bf16.msra.mxu0 %v292
        %316 = vmatprep.subr.bf16.mxu0 0
        %317 = vmatpush1.bf16.msra.mxu0 %v293
        %318 = vmatprep.subr.bf16.mxu0 0
        %319 = vmatpush1.bf16.msra.mxu0 0
        %320 = vmatprep.subr.bf16.mxu0 0
        %321 = vmatpush1.bf16.msra.mxu0 0
        %322 = vmatprep.subr.bf16.mxu0 0
        %323 = vmatpush1.bf16.msra.mxu0 0
        %324 = vmatprep.subr.bf16.mxu0 0
        %325 = vmatpush1.bf16.msra.mxu0 0
        %326 = vmatprep.subr.bf16.mxu0 0
        %327 = vmatpush1.bf16.msra.mxu0 0
        %328 = vmatprep.subr.bf16.mxu0 0
        %329 = vmatpush1.bf16.msra.mxu0 0
        %330 = vmatprep.subr.bf16.mxu0 0
        %331 = vmatpush1.bf16.msra.mxu0 0
        %332 = vmatprep.subr.bf16.mxu0 0
        %333 = vmatpush1.bf16.msra.mxu0 0
        %334 = vmatprep.mubr.bf16.mxu0 0
        %335 = vmatmul.mubr.bf16.gmra.mrb[0].mxu0 %v252
        %v336 = vpop.f32.mrb[0].mxu0
        %v337 = vadd.f32 %v246, %v336
        %v338 = vpop.f32.mrb[0].mxu0
        %v339 = vpop.f32.mrb[0].mxu0
        %v340 = vadd.f32 %v246, %v339
        %v341 = vpop.f32.mrb[0].mxu0
        %342 = vdwg.mxu0
        %v343 = vmul.f32 %v337, %v337
        %v344 = vmul.f32 %v340, %v340
        %v345 = vmul.f32 %v337, %v343
        %v346 = vmul.f32 %v340, %v344
        %v347 = vmul.f32 %v345, 0.044715
        %v348 = vmul.f32 %v346, 0.044715
        %v349 = vadd.f32 %v337, %v347
        %v350 = vadd.f32 %v340, %v348
        %v351 = vmul.f32 %v349, 0.7978846
        %v352 = vmul.f32 %v350, 0.7978846
        %v353 = vtanh.pop %v351
        %v354 = vtanh.pop %v352
        %v355 = vadd.f32 %v353, 1.0
        %v356 = vadd.f32 %v354, 1.0
        %v357 = vmul.f32 %v355, 0.5
        %v358 = vmul.f32 %v356, 0.5
        %v359 = vmul.f32 %v337, %v357
        %v360 = vmul.f32 %v340, %v358
        %v361 = vmul.f32 %v359, 1.7015043
        %v362 = vmul.f32 %v360, 1.7015043
        %v363 = vadd.f32 %v361, %v362
        %v364 = vrot.slane %v363, 4
        %v365 = vadd.f32 %v363, %v364
        %v366 = vrot.slane %v365, 2
        %v367 = vadd.f32 %v365, %v366
        %v368 = vrot.slane %v367, 1
        %v369 = vadd.f32 %v367, %v368
        %v370 = vrcp.pop 16.0
        %v371 = vmul.f32 %v369, %v370
        %v372 = vpack.c.bf16 %v371, %v371
        %v373 = vld [vmem:[%s3] sm:$0xf]
        %v374 = vld [vmem:[%s3 + $0x4] sm:$0xf]
        %v375 = vld [vmem:[%s3 + $0x8] sm:$0xf]
        %v376 = vld [vmem:[%s3 + $0xc] sm:$0xf]
        %v377 = vld [vmem:[%s3 + $0x10] sm:$0xf]
        %v378 = vld [vmem:[%s3 + $0x14] sm:$0xf]
        %v379 = vld [vmem:[%s3 + $0x18] sm:$0xf]
        %v380 = vld [vmem:[%s3 + $0x1c] sm:$0xf]
        %v381 = vld [vmem:[%s3 + $0x20] sm:$0xf]
        %v382 = vld [vmem:[%s3 + $0x24] sm:$0xf]
        %v383 = vld [vmem:[%s3 + $0x28] sm:$0xf]
        %v384 = vld [vmem:[%s3 + $0x2c] sm:$0xf]
        %v385 = vld [vmem:[%s3 + $0x30] sm:$0xf]
        %v386 = vld [vmem:[%s3 + $0x34] sm:$0xf]
        %v387 = vld [vmem:[%s3 + $0x38] sm:$0xf]
        %v388 = vld [vmem:[%s3 + $0x3c] sm:$0xf]
        %v389 = vld [vmem:[%s4] sm:$0x1]
        %v406 = vunpack.c.l.b16 %v373
        %v407 = vunpack.c.l.b16 %v374
        %v408 = vunpack.c.l.b16 %v375
        %v409 = vunpack.c.l.b16 %v376
        %v410 = vunpack.c.l.b16 %v377
        %v411 = vunpack.c.l.b16 %v378
        %v412 = vunpack.c.l.b16 %v379
        %v413 = vunpack.c.l.b16 %v380
        %v414 = vunpack.c.l.b16 %v381
        %v415 = vunpack.c.l.b16 %v382
        %v416 = vunpack.c.l.b16 %v383
        %v417 = vunpack.c.l.b16 %v384
        %v418 = vunpack.c.l.b16 %v385
        %v419 = vunpack.c.l.b16 %v386
        %v420 = vunpack.c.l.b16 %v387
        %v421 = vunpack.c.l.b16 %v388
        %v422 = vpack.c.b16 %v407, %v406
        %v423 = vpack.c.b16 %v409, %v408
        %v424 = vpack.c.b16 %v411, %v410
        %v425 = vpack.c.b16 %v413, %v412
        %v426 = vpack.c.b16 %v415, %v414
        %v427 = vpack.c.b16 %v417, %v416
        %v428 = vpack.c.b16 %v419, %v418
        %v429 = vpack.c.b16 %v421, %v420
        %438 = vmatprep.subr.bf16.mxu0 0
        %439 = vmatpush1.bf16.msra.mxu0 %v422
        %440 = vmatprep.subr.bf16.mxu0 0
        %441 = vmatpush1.bf16.msra.mxu0 %v423
        %442 = vmatprep.subr.bf16.mxu0 0
        %443 = vmatpush1.bf16.msra.mxu0 %v424
        %444 = vmatprep.subr.bf16.mxu0 0
        %445 = vmatpush1.bf16.msra.mxu0 %v425
        %446 = vmatprep.subr.bf16.mxu0 0
        %447 = vmatpush1.bf16.msra.mxu0 %v426
        %448 = vmatprep.subr.bf16.mxu0 0
        %449 = vmatpush1.bf16.msra.mxu0 %v427
        %450 = vmatprep.subr.bf16.mxu0 0
        %451 = vmatpush1.bf16.msra.mxu0 %v428
        %452 = vmatprep.subr.bf16.mxu0 0
        %453 = vmatpush1.bf16.msra.mxu0 %v429
        %454 = vmatprep.subr.bf16.mxu0 0
        %455 = vmatpush1.bf16.msra.mxu0 0
        %456 = vmatprep.subr.bf16.mxu0 0
        %457 = vmatpush1.bf16.msra.mxu0 0
        %458 = vmatprep.subr.bf16.mxu0 0
        %459 = vmatpush1.bf16.msra.mxu0 0
        %460 = vmatprep.subr.bf16.mxu0 0
        %461 = vmatpush1.bf16.msra.mxu0 0
        %462 = vmatprep.subr.bf16.mxu0 0
        %463 = vmatpush1.bf16.msra.mxu0 0
        %464 = vmatprep.subr.bf16.mxu0 0
        %465 = vmatpush1.bf16.msra.mxu0 0
        %466 = vmatprep.subr.bf16.mxu0 0
        %467 = vmatpush1.bf16.msra.mxu0 0
        %468 = vmatprep.subr.bf16.mxu0 0
        %469 = vmatpush1.bf16.msra.mxu0 0
        %470 = vmatprep.mubr.bf16.mxu0 0
        %471 = vmatmul.mubr.bf16.gmra.mrb[0].mxu0 %v372
        %v472 = vpop.f32.mrb[0].mxu0
        %v473 = vadd.f32 %v389, %v472
        %v474 = vpop.f32.mrb[0].mxu0
        %v475 = vpop.f32.mrb[0].mxu0
        %v476 = vpop.f32.mrb[0].mxu0
        %477 = vdwg.mxu0
        %478 = vst [vmem:[%s216] sm:$0x1] %v473
        %s479 = sand.u32 %s137, 1
        %s480 = scalar_lea.sflag [#allocation3], %s479
        %s481 = sand.u32 %s137, 1
        %s482 = scalar_lea.vmem [#allocation2], %s481
        // Predicated region
        $region41: #{nfnet_forward.7} parent=39 // pred_check
          %p483 = pneg %p147
        $region42: #{nfnet_forward.7} parent=39 // pred_check_branch
          %485 = sbr.rel (%p483) target = $region44
        $region43: #{nfnet_forward.7} parent=39 // pred_region
          %s487 = ssub.s32 16, 16
          %488 = vsyncadd %s480, %s487
          %s489 = smul.addr %s19, 16
          %s490 = scalar_lea.hbm %s5, %s489
          %s492 = sshll.u32 %s482, 4
          %s493 = int_to_ptr.vmem [resolvable:$true] %s492
          %495 = dma.vmem_to_hbm [thread:$0]  %s493, 16, %s490, %s480
        $region44: #{nfnet_forward.7} parent=39 // pred_fallthru
          _
      $region40: #{nfnet_forward.7} parent=5 // pred_fallthru
        _
      %p496 = scmp.le.s32.totalorder 2, %s14
      // Predicated region
      $region45: #{nfnet_forward.7} parent=5 // pred_check
        %p497 = pneg %p496
      $region46: #{nfnet_forward.7} parent=5 // pred_check_branch
        %499 = sbr.rel (%p497) target = $region48
      $region47: #{nfnet_forward.7} parent=5 // pred_region
        %s500 = ssub.s32 %s14, 2
        // Predicated region
        $region49: #{nfnet_forward.7} parent=47 // pred_check
          %p501 = pneg %p153
        $region50: #{nfnet_forward.7} parent=47 // pred_check_branch
          %503 = sbr.rel (%p501) target = $region52
        $region51: #{nfnet_forward.7} parent=47 // pred_region
          %s504 = sand.u32 %s138, 1
          %s505 = scalar_lea.sflag [#allocation3], %s504
          %s506 = sand.u32 %s138, 1
          %s507 = scalar_lea.vmem [#allocation2], %s506
          %508 = dma.done %s505, 16
        $region52: #{nfnet_forward.7} parent=47 // pred_fallthru
          _
      $region48: #{nfnet_forward.7} parent=5 // pred_fallthru
        _
    $region6: #{nfnet_forward.7} parent=1 // loop_footer
      %s18 = sadd.s32 1, %s14
    $region7: #{nfnet_forward.7} parent=1 // loop_footer_branch
      %13 = sbr.rel target = $region3
    $region8: #{nfnet_forward.7} parent=1 // loop_exit
      _
    %509 = vsyncpa [#allocation3], 1
    %s510 = scalar_lea.sflag [#allocation3], 1
    %511 = vsyncpa %s510, 1

// kernel: nfnet_forward.6
$region0: #{nfnet_forward.6}
  #allocation0 [shape = 'u32[]', space=smem, size = 0x4, offset = 0x4, fixed_abs, tag = 'smem constant byte address 0x4 - core index']
  #allocation1 [shape = 'u32[144,128]{1,0:T(1,128)}', space=vmem, size = 0x12000, scoped, tag = 'internal scratch']
  %s0 = inlined_call_operand.vmem [shape: bf16[2,16,128], index: 0, kind: input, shape index: {}]
  %s1 = inlined_call_operand.vmem [shape: bf16[2,16,128], index: 1, kind: input, shape index: {}]
  %s2 = inlined_call_operand.vmem [shape: bf16[128,128], index: 2, kind: input, shape index: {}]
  %s3 = inlined_call_operand.vmem [shape: f32[1,128], index: 3, kind: input, shape index: {}]
  %s4 = inlined_call_operand.vmem [shape: bf16[128,128], index: 4, kind: input, shape index: {}]
  %s5 = inlined_call_operand.vmem [shape: f32[1,128], index: 5, kind: input, shape index: {}]
  %s6 = inlined_call_operand.vmem [shape: bf16[128,128], index: 6, kind: input, shape index: {}]
  %s7 = inlined_call_operand.vmem [shape: f32[1,128], index: 7, kind: input, shape index: {}]
  %s8 = inlined_call_operand.vmem [shape: bf16[128,128], index: 8, kind: input, shape index: {}]
  %s9 = inlined_call_operand.vmem [shape: f32[1,128], index: 9, kind: input, shape index: {}]
  %s10 = inlined_call_operand.vmem [shape: bf16[2,16,128], index: 10, kind: output, shape index: {}]
  %s11 = sld [smem:[#allocation0]]
  $region73: #{nfnet_forward.6} parent=0
    _
  %s13 = ssub.s32 1, %s11
  %s14 = scalar_select 0, %s13, %s11
  loop: start=0, step=1, limit=4
  $region2: #{nfnet_forward.6} parent=0 // loop_pre_header
    _
  $region3: #{nfnet_forward.6} parent=0 // loop_header
    %s16 = sphi 0, %s20
    %p17 = scmp.ge.s32.totalorder %s16, 4
    %s26 = sphi 0, %s28
    %s29 = sphi 0, %s26
    %s30 = sphi 0, %s29
    %s46 = sphi 0, %s30
    %s52 = sphi 0, %s54
    %s55 = sphi 0, %s52
    %s56 = sphi 0, %s55
    %s72 = sphi 0, %s56
    %s76 = sphi 0, %s76
    %s78 = sphi 0, %s76
    %s79 = sphi 0, %s78
    %s93 = sphi 0, %s79
    %s97 = sphi 0, %s97
    %s99 = sphi 0, %s97
    %s100 = sphi 0, %s99
    %s114 = sphi 0, %s100
    %s118 = sphi 0, %s118
    %s120 = sphi 0, %s118
    %s121 = sphi 0, %s120
    %s135 = sphi 0, %s121
    %s139 = sphi 0, %s139
    %s141 = sphi 0, %s139
    %s142 = sphi 0, %s141
    %s156 = sphi 0, %s142
    %s160 = sphi 0, %s160
    %s162 = sphi 0, %s160
    %s163 = sphi 0, %s162
    %s177 = sphi 0, %s163
    %s181 = sphi 0, %s181
    %s183 = sphi 0, %s181
    %s184 = sphi 0, %s183
    %s198 = sphi 0, %s184
    %s202 = sphi 0, %s202
    %s204 = sphi 0, %s202
    %s205 = sphi 0, %s204
    %s219 = sphi 0, %s205
    %s223 = sphi 0, %s223
    %s225 = sphi 0, %s223
    %s226 = sphi 0, %s225
    %s240 = sphi 0, %s226
    %s246 = sphi 0, %s248
    %s249 = sphi 0, %s246
    %s250 = sphi 0, %s249
    %s266 = sphi 0, %s250
  $region4: #{nfnet_forward.6} parent=0 // loop_header_branch
    %19 = sbr.rel (%p17) target = $region8
  $region5: #{nfnet_forward.6} parent=0 // loop_body
    %s21 = ssub.s32 %s16, 1
    %s22 = ssub.s32 %s16, 2
    %s23 = sadd.s32 %s16, 1
    %s24 = ssub.s32 %s16, %s23
    %p25 = scmp.eq.s32.totalorder %s24, 0
    %s27 = sadd.s32 %s26, 1
    %s28 = scalar_select %p25, %s26, %s27
    %p31 = pneg %p25
    %p32 = scmp.eq.s32.totalorder %s16, 1
    %p33 = por %p31, %p32
    %p34 = scmp.ne.s32.totalorder %s26, %s29
    %p35 = scmp.eq.s32.totalorder %s16, 0
    %p36 = por %p34, %p35
    %p37 = scmp.ne.s32.totalorder %s26, %s29
    %p38 = scmp.eq.s32.totalorder %s21, 1
    %p39 = por %p37, %p38
    %p40 = scmp.ne.s32.totalorder %s29, %s30
    %p41 = scmp.eq.s32.totalorder %s21, 0
    %p42 = por %p40, %p41
    %p43 = scmp.ne.s32.totalorder %s29, %s30
    %p44 = scmp.eq.s32.totalorder %s22, 1
    %p45 = por %p43, %p44
    %p47 = scmp.ne.s32.totalorder %s30, %s46
    %p48 = scmp.eq.s32.totalorder %s22, 0
    %p49 = por %p47, %p48
    %s50 = ssub.s32 %s16, %s23
    %p51 = scmp.eq.s32.totalorder %s50, 0
    %s53 = sadd.s32 %s52, 1
    %s54 = scalar_select %p51, %s52, %s53
    %p57 = pneg %p51
    %p58 = scmp.eq.s32.totalorder %s16, 1
    %p59 = por %p57, %p58
    %p60 = scmp.ne.s32.totalorder %s52, %s55
    %p61 = scmp.eq.s32.totalorder %s16, 0
    %p62 = por %p60, %p61
    %p63 = scmp.ne.s32.totalorder %s52, %s55
    %p64 = scmp.eq.s32.totalorder %s21, 1
    %p65 = por %p63, %p64
    %p66 = scmp.ne.s32.totalorder %s55, %s56
    %p67 = scmp.eq.s32.totalorder %s21, 0
    %p68 = por %p66, %p67
    %p69 = scmp.ne.s32.totalorder %s55, %s56
    %p70 = scmp.eq.s32.totalorder %s22, 1
    %p71 = por %p69, %p70
    %p73 = scmp.ne.s32.totalorder %s56, %s72
    %p74 = scmp.eq.s32.totalorder %s22, 0
    %p75 = por %p73, %p74
    %s77 = sadd.s32 %s76, 1
    %p80 = scmp.eq.s32.totalorder %s16, 1
    %p81 = scmp.ne.s32.totalorder %s76, %s78
    %p82 = scmp.eq.s32.totalorder %s16, 0
    %p83 = por %p81, %p82
    %p84 = scmp.ne.s32.totalorder %s76, %s78
    %p85 = scmp.eq.s32.totalorder %s21, 1
    %p86 = por %p84, %p85
    %p87 = scmp.ne.s32.totalorder %s78, %s79
    %p88 = scmp.eq.s32.totalorder %s21, 0
    %p89 = por %p87, %p88
    %p90 = scmp.ne.s32.totalorder %s78, %s79
    %p91 = scmp.eq.s32.totalorder %s22, 1
    %p92 = por %p90, %p91
    %p94 = scmp.ne.s32.totalorder %s79, %s93
    %p95 = scmp.eq.s32.totalorder %s22, 0
    %p96 = por %p94, %p95
    %s98 = sadd.s32 %s97, 1
    %p101 = scmp.eq.s32.totalorder %s16, 1
    %p102 = scmp.ne.s32.totalorder %s97, %s99
    %p103 = scmp.eq.s32.totalorder %s16, 0
    %p104 = por %p102, %p103
    %p105 = scmp.ne.s32.totalorder %s97, %s99
    %p106 = scmp.eq.s32.totalorder %s21, 1
    %p107 = por %p105, %p106
    %p108 = scmp.ne.s32.totalorder %s99, %s100
    %p109 = scmp.eq.s32.totalorder %s21, 0
    %p110 = por %p108, %p109
    %p111 = scmp.ne.s32.totalorder %s99, %s100
    %p112 = scmp.eq.s32.totalorder %s22, 1
    %p113 = por %p111, %p112
    %p115 = scmp.ne.s32.totalorder %s100, %s114
    %p116 = scmp.eq.s32.totalorder %s22, 0
    %p117 = por %p115, %p116
    %s119 = sadd.s32 %s118, 1
    %p122 = scmp.eq.s32.totalorder %s16, 1
    %p123 = scmp.ne.s32.totalorder %s118, %s120
    %p124 = scmp.eq.s32.totalorder %s16, 0
    %p125 = por %p123, %p124
    %p126 = scmp.ne.s32.totalorder %s118, %s120
    %p127 = scmp.eq.s32.totalorder %s21, 1
    %p128 = por %p126, %p127
    %p129 = scmp.ne.s32.totalorder %s120, %s121
    %p130 = scmp.eq.s32.totalorder %s21, 0
    %p131 = por %p129, %p130
    %p132 = scmp.ne.s32.totalorder %s120, %s121
    %p133 = scmp.eq.s32.totalorder %s22, 1
    %p134 = por %p132, %p133
    %p136 = scmp.ne.s32.totalorder %s121, %s135
    %p137 = scmp.eq.s32.totalorder %s22, 0
    %p138 = por %p136, %p137
    %s140 = sadd.s32 %s139, 1
    %p143 = scmp.eq.s32.totalorder %s16, 1
    %p144 = scmp.ne.s32.totalorder %s139, %s141
    %p145 = scmp.eq.s32.totalorder %s16, 0
    %p146 = por %p144, %p145
    %p147 = scmp.ne.s32.totalorder %s139, %s141
    %p148 = scmp.eq.s32.totalorder %s21, 1
    %p149 = por %p147, %p148
    %p150 = scmp.ne.s32.totalorder %s141, %s142
    %p151 = scmp.eq.s32.totalorder %s21, 0
    %p152 = por %p150, %p151
    %p153 = scmp.ne.s32.totalorder %s141, %s142
    %p154 = scmp.eq.s32.totalorder %s22, 1
    %p155 = por %p153, %p154
    %p157 = scmp.ne.s32.totalorder %s142, %s156
    %p158 = scmp.eq.s32.totalorder %s22, 0
    %p159 = por %p157, %p158
    %s161 = sadd.s32 %s160, 1
    %p164 = scmp.eq.s32.totalorder %s16, 1
    %p165 = scmp.ne.s32.totalorder %s160, %s162
    %p166 = scmp.eq.s32.totalorder %s16, 0
    %p167 = por %p165, %p166
    %p168 = scmp.ne.s32.totalorder %s160, %s162
    %p169 = scmp.eq.s32.totalorder %s21, 1
    %p170 = por %p168, %p169
    %p171 = scmp.ne.s32.totalorder %s162, %s163
    %p172 = scmp.eq.s32.totalorder %s21, 0
    %p173 = por %p171, %p172
    %p174 = scmp.ne.s32.totalorder %s162, %s163
    %p175 = scmp.eq.s32.totalorder %s22, 1
    %p176 = por %p174, %p175
    %p178 = scmp.ne.s32.totalorder %s163, %s177
    %p179 = scmp.eq.s32.totalorder %s22, 0
    %p180 = por %p178, %p179
    %s182 = sadd.s32 %s181, 1
    %p185 = scmp.eq.s32.totalorder %s16, 1
    %p186 = scmp.ne.s32.totalorder %s181, %s183
    %p187 = scmp.eq.s32.totalorder %s16, 0
    %p188 = por %p186, %p187
    %p189 = scmp.ne.s32.totalorder %s181, %s183
    %p190 = scmp.eq.s32.totalorder %s21, 1
    %p191 = por %p189, %p190
    %p192 = scmp.ne.s32.totalorder %s183, %s184
    %p193 = scmp.eq.s32.totalorder %s21, 0
    %p194 = por %p192, %p193
    %p195 = scmp.ne.s32.totalorder %s183, %s184
    %p196 = scmp.eq.s32.totalorder %s22, 1
    %p197 = por %p195, %p196
    %p199 = scmp.ne.s32.totalorder %s184, %s198
    %p200 = scmp.eq.s32.totalorder %s22, 0
    %p201 = por %p199, %p200
    %s203 = sadd.s32 %s202, 1
    %p206 = scmp.eq.s32.totalorder %s16, 1
    %p207 = scmp.ne.s32.totalorder %s202, %s204
    %p208 = scmp.eq.s32.totalorder %s16, 0
    %p209 = por %p207, %p208
    %p210 = scmp.ne.s32.totalorder %s202, %s204
    %p211 = scmp.eq.s32.totalorder %s21, 1
    %p212 = por %p210, %p211
    %p213 = scmp.ne.s32.totalorder %s204, %s205
    %p214 = scmp.eq.s32.totalorder %s21, 0
    %p215 = por %p213, %p214
    %p216 = scmp.ne.s32.totalorder %s204, %s205
    %p217 = scmp.eq.s32.totalorder %s22, 1
    %p218 = por %p216, %p217
    %p220 = scmp.ne.s32.totalorder %s205, %s219
    %p221 = scmp.eq.s32.totalorder %s22, 0
    %p222 = por %p220, %p221
    %s224 = sadd.s32 %s223, 1
    %p227 = scmp.eq.s32.totalorder %s16, 1
    %p228 = scmp.ne.s32.totalorder %s223, %s225
    %p229 = scmp.eq.s32.totalorder %s16, 0
    %p230 = por %p228, %p229
    %p231 = scmp.ne.s32.totalorder %s223, %s225
    %p232 = scmp.eq.s32.totalorder %s21, 1
    %p233 = por %p231, %p232
    %p234 = scmp.ne.s32.totalorder %s225, %s226
    %p235 = scmp.eq.s32.totalorder %s21, 0
    %p236 = por %p234, %p235
    %p237 = scmp.ne.s32.totalorder %s225, %s226
    %p238 = scmp.eq.s32.totalorder %s22, 1
    %p239 = por %p237, %p238
    %p241 = scmp.ne.s32.totalorder %s226, %s240
    %p242 = scmp.eq.s32.totalorder %s22, 0
    %p243 = por %p241, %p242
    %s244 = ssub.s32 %s16, %s23
    %p245 = scmp.eq.s32.totalorder %s244, 0
    %s247 = sadd.s32 %s246, 1
    %s248 = scalar_select %p245, %s246, %s247
    %p251 = pneg %p245
    %p252 = scmp.eq.s32.totalorder %s16, 1
    %p253 = por %p251, %p252
    %p254 = scmp.ne.s32.totalorder %s246, %s249
    %p255 = scmp.eq.s32.totalorder %s16, 0
    %p256 = por %p254, %p255
    %p257 = scmp.ne.s32.totalorder %s246, %s249
    %p258 = scmp.eq.s32.totalorder %s21, 1
    %p259 = por %p257, %p258
    %p260 = scmp.ne.s32.totalorder %s249, %s250
    %p261 = scmp.eq.s32.totalorder %s21, 0
    %p262 = por %p260, %p261
    %p263 = scmp.ne.s32.totalorder %s249, %s250
    %p264 = scmp.eq.s32.totalorder %s22, 1
    %p265 = por %p263, %p264
    %p267 = scmp.ne.s32.totalorder %s250, %s266
    %p268 = scmp.eq.s32.totalorder %s22, 0
    %p269 = por %p267, %p268
    %p270 = scmp.le.s32.totalorder 1, %s16
    %p271 = scmp.lt.s32.totalorder %s16, 3
    %p272 = pnand %p270, %p271
    %p273 = pneg %p272
    // Predicated region
    $region9: #{nfnet_forward.6} parent=5 // pred_check
      _
    $region10: #{nfnet_forward.6} parent=5 // pred_check_branch
      %275 = sbr.rel (%p272) target = $region12
    $region11: #{nfnet_forward.6} parent=5 // pred_region
      %s276 = ssub.s32 %s16, 1
      // Predicated region
      $region13: #{nfnet_forward.6} parent=11 // pred_check
        %p277 = pneg %p89
      $region14: #{nfnet_forward.6} parent=11 // pred_check_branch
        %279 = sbr.rel (%p277) target = $region16
      $region15: #{nfnet_forward.6} parent=11 // pred_region
        _
      $region16: #{nfnet_forward.6} parent=11 // pred_fallthru
        _
      // Predicated region
      $region17: #{nfnet_forward.6} parent=11 // pred_check
        %p280 = pneg %p110
      $region18: #{nfnet_forward.6} parent=11 // pred_check_branch
        %282 = sbr.rel (%p280) target = $region20
      $region19: #{nfnet_forward.6} parent=11 // pred_region
        _
      $region20: #{nfnet_forward.6} parent=11 // pred_fallthru
        _
      // Predicated region
      $region21: #{nfnet_forward.6} parent=11 // pred_check
        %p283 = pneg %p131
      $region22: #{nfnet_forward.6} parent=11 // pred_check_branch
        %285 = sbr.rel (%p283) target = $region24
      $region23: #{nfnet_forward.6} parent=11 // pred_region
        _
      $region24: #{nfnet_forward.6} parent=11 // pred_fallthru
        _
      // Predicated region
      $region25: #{nfnet_forward.6} parent=11 // pred_check
        %p286 = pneg %p152
      $region26: #{nfnet_forward.6} parent=11 // pred_check_branch
        %288 = sbr.rel (%p286) target = $region28
      $region27: #{nfnet_forward.6} parent=11 // pred_region
        _
      $region28: #{nfnet_forward.6} parent=11 // pred_fallthru
        _
      // Predicated region
      $region29: #{nfnet_forward.6} parent=11 // pred_check
        %p289 = pneg %p173
      $region30: #{nfnet_forward.6} parent=11 // pred_check_branch
        %291 = sbr.rel (%p289) target = $region32
      $region31: #{nfnet_forward.6} parent=11 // pred_region
        _
      $region32: #{nfnet_forward.6} parent=11 // pred_fallthru
        _
      // Predicated region
      $region33: #{nfnet_forward.6} parent=11 // pred_check
        %p292 = pneg %p194
      $region34: #{nfnet_forward.6} parent=11 // pred_check_branch
        %294 = sbr.rel (%p292) target = $region36
      $region35: #{nfnet_forward.6} parent=11 // pred_region
        _
      $region36: #{nfnet_forward.6} parent=11 // pred_fallthru
        _
      // Predicated region
      $region37: #{nfnet_forward.6} parent=11 // pred_check
        %p295 = pneg %p215
      $region38: #{nfnet_forward.6} parent=11 // pred_check_branch
        %297 = sbr.rel (%p295) target = $region40
      $region39: #{nfnet_forward.6} parent=11 // pred_region
        _
      $region40: #{nfnet_forward.6} parent=11 // pred_fallthru
        _
      // Predicated region
      $region41: #{nfnet_forward.6} parent=11 // pred_check
        %p298 = pneg %p236
      $region42: #{nfnet_forward.6} parent=11 // pred_check_branch
        %300 = sbr.rel (%p298) target = $region44
      $region43: #{nfnet_forward.6} parent=11 // pred_region
        _
      $region44: #{nfnet_forward.6} parent=11 // pred_fallthru
        _
    $region12: #{nfnet_forward.6} parent=5 // pred_fallthru
      _
    %p301 = scmp.lt.s32.totalorder %s16, 2
    // Predicated region
    $region45: #{nfnet_forward.6} parent=5 // pred_check
      %p302 = pneg %p301
    $region46: #{nfnet_forward.6} parent=5 // pred_check_branch
      %304 = sbr.rel (%p302) target = $region48
    $region47: #{nfnet_forward.6} parent=5 // pred_region
      // Predicated region
      $region49: #{nfnet_forward.6} parent=47 // pred_check
        %p305 = pneg %p36
      $region50: #{nfnet_forward.6} parent=47 // pred_check_branch
        %307 = sbr.rel (%p305) target = $region52
      $region51: #{nfnet_forward.6} parent=47 // pred_region
        %p308 = scmp.lt.s32.totalorder %s16, 1
        %s309 = scalar_select %p308, %s16, 1
        %s310 = smul.addr %s309, 2
        %s311 = smul.addr %s310, 4
        %s312 = scalar_lea.vmem %s0, %s311
      $region52: #{nfnet_forward.6} parent=47 // pred_fallthru
        _
      // Predicated region
      $region53: #{nfnet_forward.6} parent=47 // pred_check
        %p313 = pneg %p62
      $region54: #{nfnet_forward.6} parent=47 // pred_check_branch
        %315 = sbr.rel (%p313) target = $region56
      $region55: #{nfnet_forward.6} parent=47 // pred_region
        %p316 = scmp.lt.s32.totalorder %s16, 1
        %s317 = scalar_select %p316, %s16, 1
        %s318 = smul.addr %s317, 2
        %s319 = smul.addr %s318, 4
        %s320 = scalar_lea.vmem %s1, %s319
      $region56: #{nfnet_forward.6} parent=47 // pred_fallthru
        _
    $region48: #{nfnet_forward.6} parent=5 // pred_fallthru
      _
    %p321 = scmp.le.s32.totalorder 1, %s16
    %p322 = scmp.lt.s32.totalorder %s16, 3
    %p323 = pnand %p321, %p322
    %p324 = pneg %p323
    // Predicated region
    $region57: #{nfnet_forward.6} parent=5 // pred_check
      _
    $region58: #{nfnet_forward.6} parent=5 // pred_check_branch
      %326 = sbr.rel (%p323) target = $region60
    $region59: #{nfnet_forward.6} parent=5 // pred_region
      %s327 = ssub.s32 %s16, 1
      %p328 = scmp.lt.s32.totalorder %s21, 1
      %s329 = scalar_select %p328, %s21, 1
      %s330 = smul.addr %s329, 2
      %s331 = smul.addr %s330, 4
      %s332 = scalar_lea.vmem %s0, %s331
      %p333 = pneg %p42
      %p334 = pneg %p39
      %p335 = scmp.lt.s32.totalorder %s21, 1
      %s336 = scalar_select %p335, %s21, 1
      %s337 = smul.addr %s336, 2
      %s338 = smul.addr %s337, 4
      %s339 = scalar_lea.vmem %s1, %s338
      %p340 = pneg %p68
      %p341 = pneg %p65
      %p342 = pneg %p89
      %p343 = pneg %p86
      %p344 = pneg %p110
      %p345 = pneg %p107
      %p346 = pneg %p131
      %p347 = pneg %p128
      %p348 = pneg %p152
      %p349 = pneg %p149
      %p350 = pneg %p173
      %p351 = pneg %p170
      %p352 = pneg %p194
      %p353 = pneg %p191
      %p354 = pneg %p215
      %p355 = pneg %p212
      %p356 = pneg %p236
      %p357 = pneg %p233
      %p358 = pneg %p262
      %p359 = pneg %p259
      %p360 = scmp.lt.s32.totalorder %s21, 1
      %s361 = scalar_select %p360, %s21, 1
      %s362 = smul.addr %s361, 2
      %s363 = smul.addr %s362, 4
      %s364 = scalar_lea.vmem %s10, %s363
      %p365 = scmp.lt.s32.totalorder %s21, 1
      %s366 = scalar_select %p365, %s21, 1
      %s367 = smul.addr %s366, 2
      %s368 = smul.addr %s367, 4
      %s369 = scalar_lea.vmem %s0, %s368
      %p370 = scmp.lt.s32.totalorder %s21, 1
      %s371 = scalar_select %p370, %s21, 1
      %s372 = smul.addr %s371, 2
      %s373 = smul.addr %s372, 4
      %s374 = scalar_lea.vmem %s1, %s373
      %p375 = scmp.lt.s32.totalorder %s21, 1
      %s376 = scalar_select %p375, %s21, 1
      %s377 = smul.addr %s376, 2
      %s378 = smul.addr %s377, 4
      %s379 = scalar_lea.vmem %s10, %s378
      %v381 = vld [vmem:[%s369] sm:$0xf]
      %v382 = vld [vmem:[%s369 + $0x4] sm:$0xf]
      %v383 = vld [vmem:[%s2] sm:$0xf]
      %v384 = vld [vmem:[%s2 + $0x4] sm:$0xf]
      %v385 = vld [vmem:[%s2 + $0x8] sm:$0xf]
      %v386 = vld [vmem:[%s2 + $0xc] sm:$0xf]
      %v387 = vld [vmem:[%s2 + $0x10] sm:$0xf]
      %v388 = vld [vmem:[%s2 + $0x14] sm:$0xf]
      %v389 = vld [vmem:[%s2 + $0x18] sm:$0xf]
      %v390 = vld [vmem:[%s2 + $0x1c] sm:$0xf]
      %v391 = vld [vmem:[%s2 + $0x20] sm:$0xf]
      %v392 = vld [vmem:[%s2 + $0x24] sm:$0xf]
      %v393 = vld [vmem:[%s2 + $0x28] sm:$0xf]
      %v394 = vld [vmem:[%s2 + $0x2c] sm:$0xf]
      %v395 = vld [vmem:[%s2 + $0x30] sm:$0xf]
      %v396 = vld [vmem:[%s2 + $0x34] sm:$0xf]
      %v397 = vld [vmem:[%s2 + $0x38] sm:$0xf]
      %v398 = vld [vmem:[%s2 + $0x3c] sm:$0xf]
      %v399 = vld [vmem:[%s3] sm:$0x1]
      %v401 = vlaneseq
      %v402 = vshrl.u32 %v401, 7
      %v403 = vsub.s32 0, %v402
      %v404 = vrot.slane %v399, %v403
      %v408 = vunpack.c.l.b16 %v381
      %v409 = vunpack.c.l.b16 %v382
      %v410 = vpack.c.b16 %v409, %v408
      %v428 = vunpack.c.l.b16 %v383
      %v429 = vunpack.c.l.b16 %v384
      %v430 = vunpack.c.l.b16 %v385
      %v431 = vunpack.c.l.b16 %v386
      %v432 = vunpack.c.l.b16 %v387
      %v433 = vunpack.c.l.b16 %v388
      %v434 = vunpack.c.l.b16 %v389
      %v435 = vunpack.c.l.b16 %v390
      %v436 = vunpack.c.l.b16 %v391
      %v437 = vunpack.c.l.b16 %v392
      %v438 = vunpack.c.l.b16 %v393
      %v439 = vunpack.c.l.b16 %v394
      %v440 = vunpack.c.l.b16 %v395
      %v441 = vunpack.c.l.b16 %v396
      %v442 = vunpack.c.l.b16 %v397
      %v443 = vunpack.c.l.b16 %v398
      %v444 = vpack.c.b16 %v429, %v428
      %v445 = vpack.c.b16 %v431, %v430
      %v446 = vpack.c.b16 %v433, %v432
      %v447 = vpack.c.b16 %v435, %v434
      %v448 = vpack.c.b16 %v437, %v436
      %v449 = vpack.c.b16 %v439, %v438
      %v450 = vpack.c.b16 %v441, %v440
      %v451 = vpack.c.b16 %v443, %v442
      %460 = vmatprep.subr.bf16.mxu0 0
      %461 = vmatpush1.bf16.msra.mxu0 %v444
      %462 = vmatprep.subr.bf16.mxu0 0
      %463 = vmatpush1.bf16.msra.mxu0 %v445
      %464 = vmatprep.subr.bf16.mxu0 0
      %465 = vmatpush1.bf16.msra.mxu0 %v446
      %466 = vmatprep.subr.bf16.mxu0 0
      %467 = vmatpush1.bf16.msra.mxu0 %v447
      %468 = vmatprep.subr.bf16.mxu0 0
      %469 = vmatpush1.bf16.msra.mxu0 %v448
      %470 = vmatprep.subr.bf16.mxu0 0
      %471 = vmatpush1.bf16.msra.mxu0 %v449
      %472 = vmatprep.subr.bf16.mxu0 0
      %473 = vmatpush1.bf16.msra.mxu0 %v450
      %474 = vmatprep.subr.bf16.mxu0 0
      %475 = vmatpush1.bf16.msra.mxu0 %v451
      %476 = vmatprep.subr.bf16.mxu0 0
      %477 = vmatpush1.bf16.msra.mxu0 0
      %478 = vmatprep.subr.bf16.mxu0 0
      %479 = vmatpush1.bf16.msra.mxu0 0
      %480 = vmatprep.subr.bf16.mxu0 0
      %481 = vmatpush1.bf16.msra.mxu0 0
      %482 = vmatprep.subr.bf16.mxu0 0
      %483 = vmatpush1.bf16.msra.mxu0 0
      %484 = vmatprep.subr.bf16.mxu0 0
      %485 = vmatpush1.bf16.msra.mxu0 0
      %486 = vmatprep.subr.bf16.mxu0 0
      %487 = vmatpush1.bf16.msra.mxu0 0
      %488 = vmatprep.subr.bf16.mxu0 0
      %489 = vmatpush1.bf16.msra.mxu0 0
      %490 = vmatprep.subr.bf16.mxu0 0
      %491 = vmatpush1.bf16.msra.mxu0 0
      %492 = vmatprep.mubr.bf16.mxu0 0
      %493 = vmatmul.mubr.bf16.gmra.mrb[0].mxu0 %v410
      %v494 = vpop.f32.mrb[0].mxu0
      %v495 = vadd.f32 %v404, %v494
      %v496 = vpop.f32.mrb[0].mxu0
      %v497 = vpop.f32.mrb[0].mxu0
      %v498 = vadd.f32 %v404, %v497
      %v499 = vpop.f32.mrb[0].mxu0
      %500 = vdwg.mxu0
      %v501 = vadd.f32 %v495, %v498
      %v502 = vrot.slane %v501, 4
      %v503 = vadd.f32 %v501, %v502
      %v504 = vrot.slane %v503, 2
      %v505 = vadd.f32 %v503, %v504
      %v506 = vrot.slane %v505, 1
      %v507 = vadd.f32 %v505, %v506
      %v508 = vrcp.pop 16.0
      %v509 = vmul.f32 %v507, %v508
      %v510 = vpack.c.bf16 %v509, %v509
      %v511 = vld [vmem:[%s6] sm:$0xf]
      %v512 = vld [vmem:[%s6 + $0x4] sm:$0xf]
      %v513 = vld [vmem:[%s6 + $0x8] sm:$0xf]
      %v514 = vld [vmem:[%s6 + $0xc] sm:$0xf]
      %v515 = vld [vmem:[%s6 + $0x10] sm:$0xf]
      %v516 = vld [vmem:[%s6 + $0x14] sm:$0xf]
      %v517 = vld [vmem:[%s6 + $0x18] sm:$0xf]
      %v518 = vld [vmem:[%s6 + $0x1c] sm:$0xf]
      %v519 = vld [vmem:[%s6 + $0x20] sm:$0xf]
      %v520 = vld [vmem:[%s6 + $0x24] sm:$0xf]
      %v521 = vld [vmem:[%s6 + $0x28] sm:$0xf]
      %v522 = vld [vmem:[%s6 + $0x2c] sm:$0xf]
      %v523 = vld [vmem:[%s6 + $0x30] sm:$0xf]
      %v524 = vld [vmem:[%s6 + $0x34] sm:$0xf]
      %v525 = vld [vmem:[%s6 + $0x38] sm:$0xf]
      %v526 = vld [vmem:[%s6 + $0x3c] sm:$0xf]
      %v527 = vld [vmem:[%s7] sm:$0x1]
      %v544 = vunpack.c.l.b16 %v511
      %v545 = vunpack.c.l.b16 %v512
      %v546 = vunpack.c.l.b16 %v513
      %v547 = vunpack.c.l.b16 %v514
      %v548 = vunpack.c.l.b16 %v515
      %v549 = vunpack.c.l.b16 %v516
      %v550 = vunpack.c.l.b16 %v517
      %v551 = vunpack.c.l.b16 %v518
      %v552 = vunpack.c.l.b16 %v519
      %v553 = vunpack.c.l.b16 %v520
      %v554 = vunpack.c.l.b16 %v521
      %v555 = vunpack.c.l.b16 %v522
      %v556 = vunpack.c.l.b16 %v523
      %v557 = vunpack.c.l.b16 %v524
      %v558 = vunpack.c.l.b16 %v525
      %v559 = vunpack.c.l.b16 %v526
      %v560 = vpack.c.b16 %v545, %v544
      %v561 = vpack.c.b16 %v547, %v546
      %v562 = vpack.c.b16 %v549, %v548
      %v563 = vpack.c.b16 %v551, %v550
      %v564 = vpack.c.b16 %v553, %v552
      %v565 = vpack.c.b16 %v555, %v554
      %v566 = vpack.c.b16 %v557, %v556
      %v567 = vpack.c.b16 %v559, %v558
      %576 = vmatprep.subr.bf16.mxu0 0
      %577 = vmatpush1.bf16.msra.mxu0 %v560
      %578 = vmatprep.subr.bf16.mxu0 0
      %579 = vmatpush1.bf16.msra.mxu0 %v561
      %580 = vmatprep.subr.bf16.mxu0 0
      %581 = vmatpush1.bf16.msra.mxu0 %v562
      %582 = vmatprep.subr.bf16.mxu0 0
      %583 = vmatpush1.bf16.msra.mxu0 %v563
      %584 = vmatprep.subr.bf16.mxu0 0
      %585 = vmatpush1.bf16.msra.mxu0 %v564
      %586 = vmatprep.subr.bf16.mxu0 0
      %587 = vmatpush1.bf16.msra.mxu0 %v565
      %588 = vmatprep.subr.bf16.mxu0 0
      %589 = vmatpush1.bf16.msra.mxu0 %v566
      %590 = vmatprep.subr.bf16.mxu0 0
      %591 = vmatpush1.bf16.msra.mxu0 %v567
      %592 = vmatprep.subr.bf16.mxu0 0
      %593 = vmatpush1.bf16.msra.mxu0 0
      %594 = vmatprep.subr.bf16.mxu0 0
      %595 = vmatpush1.bf16.msra.mxu0 0
      %596 = vmatprep.subr.bf16.mxu0 0
      %597 = vmatpush1.bf16.msra.mxu0 0
      %598 = vmatprep.subr.bf16.mxu0 0
      %599 = vmatpush1.bf16.msra.mxu0 0
      %600 = vmatprep.subr.bf16.mxu0 0
      %601 = vmatpush1.bf16.msra.mxu0 0
      %602 = vmatprep.subr.bf16.mxu0 0
      %603 = vmatpush1.bf16.msra.mxu0 0
      %604 = vmatprep.subr.bf16.mxu0 0
      %605 = vmatpush1.bf16.msra.mxu0 0
      %606 = vmatprep.subr.bf16.mxu0 0
      %607 = vmatpush1.bf16.msra.mxu0 0
      %608 = vmatprep.mubr.bf16.mxu0 0
      %609 = vmatmul.mubr.bf16.gmra.mrb[0].mxu0 %v510
      %v610 = vpop.f32.mrb[0].mxu0
      %v611 = vadd.f32 %v527, %v610
      %v612 = vpop.f32.mrb[0].mxu0
      %v613 = vpop.f32.mrb[0].mxu0
      %v614 = vpop.f32.mrb[0].mxu0
      %615 = vdwg.mxu0
      %v616 = vmax.f32 %v611, 0.0
      %v617 = vpack.c.bf16 %v616, %v616
      %v618 = vld [vmem:[%s8] sm:$0xf]
      %v619 = vld [vmem:[%s8 + $0x4] sm:$0xf]
      %v620 = vld [vmem:[%s8 + $0x8] sm:$0xf]
      %v621 = vld [vmem:[%s8 + $0xc] sm:$0xf]
      %v622 = vld [vmem:[%s8 + $0x10] sm:$0xf]
      %v623 = vld [vmem:[%s8 + $0x14] sm:$0xf]
      %v624 = vld [vmem:[%s8 + $0x18] sm:$0xf]
      %v625 = vld [vmem:[%s8 + $0x1c] sm:$0xf]
      %v626 = vld [vmem:[%s8 + $0x20] sm:$0xf]
      %v627 = vld [vmem:[%s8 + $0x24] sm:$0xf]
      %v628 = vld [vmem:[%s8 + $0x28] sm:$0xf]
      %v629 = vld [vmem:[%s8 + $0x2c] sm:$0xf]
      %v630 = vld [vmem:[%s8 + $0x30] sm:$0xf]
      %v631 = vld [vmem:[%s8 + $0x34] sm:$0xf]
      %v632 = vld [vmem:[%s8 + $0x38] sm:$0xf]
      %v633 = vld [vmem:[%s8 + $0x3c] sm:$0xf]
      %v634 = vld [vmem:[%s9] sm:$0x1]
      %v651 = vunpack.c.l.b16 %v618
      %v652 = vunpack.c.l.b16 %v619
      %v653 = vunpack.c.l.b16 %v620
      %v654 = vunpack.c.l.b16 %v621
      %v655 = vunpack.c.l.b16 %v622
      %v656 = vunpack.c.l.b16 %v623
      %v657 = vunpack.c.l.b16 %v624
      %v658 = vunpack.c.l.b16 %v625
      %v659 = vunpack.c.l.b16 %v626
      %v660 = vunpack.c.l.b16 %v627
      %v661 = vunpack.c.l.b16 %v628
      %v662 = vunpack.c.l.b16 %v629
      %v663 = vunpack.c.l.b16 %v630
      %v664 = vunpack.c.l.b16 %v631
      %v665 = vunpack.c.l.b16 %v632
      %v666 = vunpack.c.l.b16 %v633
      %v667 = vpack.c.b16 %v652, %v651
      %v668 = vpack.c.b16 %v654, %v653
      %v669 = vpack.c.b16 %v656, %v655
      %v670 = vpack.c.b16 %v658, %v657
      %v671 = vpack.c.b16 %v660, %v659
      %v672 = vpack.c.b16 %v662, %v661
      %v673 = vpack.c.b16 %v664, %v663
      %v674 = vpack.c.b16 %v666, %v665
      %683 = vmatprep.subr.bf16.mxu0 0
      %684 = vmatpush1.bf16.msra.mxu0 %v667
      %685 = vmatprep.subr.bf16.mxu0 0
      %686 = vmatpush1.bf16.msra.mxu0 %v668
      %687 = vmatprep.subr.bf16.mxu0 0
      %688 = vmatpush1.bf16.msra.mxu0 %v669
      %689 = vmatprep.subr.bf16.mxu0 0
      %690 = vmatpush1.bf16.msra.mxu0 %v670
      %691 = vmatprep.subr.bf16.mxu0 0
      %692 = vmatpush1.bf16.msra.mxu0 %v671
      %693 = vmatprep.subr.bf16.mxu0 0
      %694 = vmatpush1.bf16.msra.mxu0 %v672
      %695 = vmatprep.subr.bf16.mxu0 0
      %696 = vmatpush1.bf16.msra.mxu0 %v673
      %697 = vmatprep.subr.bf16.mxu0 0
      %698 = vmatpush1.bf16.msra.mxu0 %v674
      %699 = vmatprep.subr.bf16.mxu0 0
      %700 = vmatpush1.bf16.msra.mxu0 0
      %701 = vmatprep.subr.bf16.mxu0 0
      %702 = vmatpush1.bf16.msra.mxu0 0
      %703 = vmatprep.subr.bf16.mxu0 0
      %704 = vmatpush1.bf16.msra.mxu0 0
      %705 = vmatprep.subr.bf16.mxu0 0
      %706 = vmatpush1.bf16.msra.mxu0 0
      %707 = vmatprep.subr.bf16.mxu0 0
      %708 = vmatpush1.bf16.msra.mxu0 0
      %709 = vmatprep.subr.bf16.mxu0 0
      %710 = vmatpush1.bf16.msra.mxu0 0
      %711 = vmatprep.subr.bf16.mxu0 0
      %712 = vmatpush1.bf16.msra.mxu0 0
      %713 = vmatprep.subr.bf16.mxu0 0
      %714 = vmatpush1.bf16.msra.mxu0 0
      %715 = vmatprep.mubr.bf16.mxu0 0
      %716 = vmatmul.mubr.bf16.gmra.mrb[0].mxu0 %v617
      %v717 = vpop.f32.mrb[0].mxu0
      %v718 = vadd.f32 %v634, %v717
      %v719 = vpop.f32.mrb[0].mxu0
      %v720 = vpop.f32.mrb[0].mxu0
      %v721 = vpop.f32.mrb[0].mxu0
      %722 = vdwg.mxu0
      %v723 = vxor.u32 %v718, 2147483648
      %v724 = vmul.f32 %v723, 1.442695
      %v725 = vpow.pop %v724
      %v726 = vadd.f32 %v725, 1.0
      %v727 = vrcp.pop %v726
      %v728 = vmul.f32 1.0, %v727
      %v729 = vld [vmem:[%s374] sm:$0xf]
      %v730 = vld [vmem:[%s374 + $0x4] sm:$0xf]
      %v731 = vld [vmem:[%s4] sm:$0xf]
      %v732 = vld [vmem:[%s4 + $0x4] sm:$0xf]
      %v733 = vld [vmem:[%s4 + $0x8] sm:$0xf]
      %v734 = vld [vmem:[%s4 + $0xc] sm:$0xf]
      %v735 = vld [vmem:[%s4 + $0x10] sm:$0xf]
      %v736 = vld [vmem:[%s4 + $0x14] sm:$0xf]
      %v737 = vld [vmem:[%s4 + $0x18] sm:$0xf]
      %v738 = vld [vmem:[%s4 + $0x1c] sm:$0xf]
      %v739 = vld [vmem:[%s4 + $0x20] sm:$0xf]
      %v740 = vld [vmem:[%s4 + $0x24] sm:$0xf]
      %v741 = vld [vmem:[%s4 + $0x28] sm:$0xf]
      %v742 = vld [vmem:[%s4 + $0x2c] sm:$0xf]
      %v743 = vld [vmem:[%s4 + $0x30] sm:$0xf]
      %v744 = vld [vmem:[%s4 + $0x34] sm:$0xf]
      %v745 = vld [vmem:[%s4 + $0x38] sm:$0xf]
      %v746 = vld [vmem:[%s4 + $0x3c] sm:$0xf]
      %v747 = vld [vmem:[%s5] sm:$0x1]
      %v749 = vlaneseq
      %v750 = vshrl.u32 %v749, 7
      %v751 = vsub.s32 0, %v750
      %v752 = vrot.slane %v747, %v751
      %v756 = vunpack.c.l.b16 %v729
      %v757 = vunpack.c.l.b16 %v730
      %v758 = vpack.c.b16 %v757, %v756
      %v776 = vunpack.c.l.b16 %v731
      %v777 = vunpack.c.l.b16 %v732
      %v778 = vunpack.c.l.b16 %v733
      %v779 = vunpack.c.l.b16 %v734
      %v780 = vunpack.c.l.b16 %v735
      %v781 = vunpack.c.l.b16 %v736
      %v782 = vunpack.c.l.b16 %v737
      %v783 = vunpack.c.l.b16 %v738
      %v784 = vunpack.c.l.b16 %v739
      %v785 = vunpack.c.l.b16 %v740
      %v786 = vunpack.c.l.b16 %v741
      %v787 = vunpack.c.l.b16 %v742
      %v788 = vunpack.c.l.b16 %v743
      %v789 = vunpack.c.l.b16 %v744
      %v790 = vunpack.c.l.b16 %v745
      %v791 = vunpack.c.l.b16 %v746
      %v792 = vpack.c.b16 %v777, %v776
      %v793 = vpack.c.b16 %v779, %v778
      %v794 = vpack.c.b16 %v781, %v780
      %v795 = vpack.c.b16 %v783, %v782
      %v796 = vpack.c.b16 %v785, %v784
      %v797 = vpack.c.b16 %v787, %v786
      %v798 = vpack.c.b16 %v789, %v788
      %v799 = vpack.c.b16 %v791, %v790
      %808 = vmatprep.subr.bf16.mxu0 0
      %809 = vmatpush1.bf16.msra.mxu0 %v792
      %810 = vmatprep.subr.bf16.mxu0 0
      %811 = vmatpush1.bf16.msra.mxu0 %v793
      %812 = vmatprep.subr.bf16.mxu0 0
      %813 = vmatpush1.bf16.msra.mxu0 %v794
      %814 = vmatprep.subr.bf16.mxu0 0
      %815 = vmatpush1.bf16.msra.mxu0 %v795
      %816 = vmatprep.subr.bf16.mxu0 0
      %817 = vmatpush1.bf16.msra.mxu0 %v796
      %818 = vmatprep.subr.bf16.mxu0 0
      %819 = vmatpush1.bf16.msra.mxu0 %v797
      %820 = vmatprep.subr.bf16.mxu0 0
      %821 = vmatpush1.bf16.msra.mxu0 %v798
      %822 = vmatprep.subr.bf16.mxu0 0
      %823 = vmatpush1.bf16.msra.mxu0 %v799
      %824 = vmatprep.subr.bf16.mxu0 0
      %825 = vmatpush1.bf16.msra.mxu0 0
      %826 = vmatprep.subr.bf16.mxu0 0
      %827 = vmatpush1.bf16.msra.mxu0 0
      %828 = vmatprep.subr.bf16.mxu0 0
      %829 = vmatpush1.bf16.msra.mxu0 0
      %830 = vmatprep.subr.bf16.mxu0 0
      %831 = vmatpush1.bf16.msra.mxu0 0
      %832 = vmatprep.subr.bf16.mxu0 0
      %833 = vmatpush1.bf16.msra.mxu0 0
      %834 = vmatprep.subr.bf16.mxu0 0
      %835 = vmatpush1.bf16.msra.mxu0 0
      %836 = vmatprep.subr.bf16.mxu0 0
      %837 = vmatpush1.bf16.msra.mxu0 0
      %838 = vmatprep.subr.bf16.mxu0 0
      %839 = vmatpush1.bf16.msra.mxu0 0
      %840 = vmatprep.mubr.bf16.mxu0 0
      %841 = vmatmul.mubr.bf16.gmra.mrb[0].mxu0 %v758
      %v842 = vpop.f32.mrb[0].mxu0
      %v843 = vadd.f32 %v752, %v842
      %v844 = vpop.f32.mrb[0].mxu0
      %v845 = vpop.f32.mrb[0].mxu0
      %v846 = vadd.f32 %v752, %v845
      %v847 = vpop.f32.mrb[0].mxu0
      %848 = vdwg.mxu0
      %v849 = vlaneseq
      %v850 = vshrl.u32 %v849, 7
      %v851 = vsub.s32 0, %v850
      %v852 = vrot.slane %v728, %v851
      %v853 = vmul.f32 %v495, %v852
      %v854 = vmul.f32 %v498, %v852
      %v855 = vmul.f32 %v853, 0.4
      %v856 = vmul.f32 %v854, 0.4
      %v857 = vadd.f32 %v855, %v843
      %v858 = vadd.f32 %v856, %v846
      %v859 = vpack.c.bf16 %v858, %v857
      %v861 = vunpack.c.l.b16 %v859
      %v862 = vunpack.c.h.b16 %v859
      %v863 = vpack.c.b16 %v861, %v861
      %v864 = vpack.c.b16 %v862, %v862
      %867 = vst [vmem:[%s379] sm:$0xf] %v863
      %868 = vst [vmem:[%s379 + $0x4] sm:$0xf] %v864
      %p869 = scmp.lt.s32.totalorder %s21, 1
      %s870 = scalar_select %p869, %s21, 1
      %s871 = smul.addr %s870, 2
      %s872 = smul.addr %s871, 4
      %s873 = scalar_lea.vmem %s10, %s872
      // Predicated region
      $region61: #{nfnet_forward.6} parent=59 // pred_check
        %p874 = pneg %p259
      $region62: #{nfnet_forward.6} parent=59 // pred_check_branch
        %876 = sbr.rel (%p874) target = $region64
      $region63: #{nfnet_forward.6} parent=59 // pred_region
        _
      $region64: #{nfnet_forward.6} parent=59 // pred_fallthru
        _
    $region60: #{nfnet_forward.6} parent=5 // pred_fallthru
      _
    %p877 = scmp.le.s32.totalorder 2, %s16
    // Predicated region
    $region65: #{nfnet_forward.6} parent=5 // pred_check
      %p878 = pneg %p877
    $region66: #{nfnet_forward.6} parent=5 // pred_check_branch
      %880 = sbr.rel (%p878) target = $region68
    $region67: #{nfnet_forward.6} parent=5 // pred_region
      %s881 = ssub.s32 %s16, 2
      // Predicated region
      $region69: #{nfnet_forward.6} parent=67 // pred_check
        %p882 = pneg %p265
      $region70: #{nfnet_forward.6} parent=67 // pred_check_branch
        %884 = sbr.rel (%p882) target = $region72
      $region71: #{nfnet_forward.6} parent=67 // pred_region
        %p885 = scmp.lt.s32.totalorder %s22, 1
        %s886 = scalar_select %p885, %s22, 1
        %s887 = smul.addr %s886, 2
        %s888 = smul.addr %s887, 4
        %s889 = scalar_lea.vmem %s10, %s888
      $region72: #{nfnet_forward.6} parent=67 // pred_fallthru
        _
    $region68: #{nfnet_forward.6} parent=5 // pred_fallthru
      _
  $region6: #{nfnet_forward.6} parent=0 // loop_footer
    %s20 = sadd.s32 1, %s16
  $region7: #{nfnet_forward.6} parent=0 // loop_footer_branch
    %15 = sbr.rel target = $region3
  $region8: #{nfnet_forward.6} parent=0 // loop_exit
    _

</llo_original>
